<compile_context>
chip_gen: v6e
topology: v6e:2x2x1
jax: 0.10.0
libtpu: 0.0.40
codegen_flags: <defaults>
</compile_context>

<pallas_src>
import jax
import jax.numpy as jnp
from jax.experimental import pallas as pl
from jax.experimental.pallas import tpu as pltpu

# Small synthetic hyper-parameters (lane-dense toy config).
BATCH = 2
MAX_SEQ_LEN = 8
N_EMBED = 128                     # model dim (>=128 -> lane-dense)
N_LAYER = 2
N_HEADS = 2
DIM_HEAD = 64
ATTN_INNER = N_HEADS * DIM_HEAD   # == N_EMBED
FF_INNER = 4 * N_EMBED            # ff_mult = 4
VOCAB_SIZE = 1000
EPS = 1e-5                        # nn.LayerNorm default
SCALE = DIM_HEAD ** -0.5


def _layernorm(x, gamma, beta):
    mean = jnp.mean(x, axis=-1, keepdims=True)
    var = jnp.mean(jnp.square(x - mean), axis=-1, keepdims=True)
    return (x - mean) * jax.lax.rsqrt(var + EPS) * gamma + beta


def bert_stack_kernel(x_ref, ln1_g_ref, ln1_b_ref, wqkv_ref, wo_ref, bo_ref,
                      ln2_g_ref, ln2_b_ref, w1_ref, b1_ref, w2_ref, b2_ref,
                      fg_ref, fb_ref, o_ref, carry_ref):
    """Grid = (batch, layer). One pre-norm encoder block per (b, l) step.

    carry_ref (VMEM scratch) holds the fp32 residual stream for the current
    batch tile across the layer axis; the output is written once, at the last
    layer, after the final LayerNorm.
    """
    layer = pl.program_id(1)

    @pl.when(layer == 0)
    def _init_carry():
        carry_ref[...] = x_ref[0]

    x = carry_ref[...]                                   # (S, D) fp32

    # Hoisted per-layer parameters (read refs exactly once).
    ln1_g = ln1_g_ref[0]
    ln1_b = ln1_b_ref[0]
    ln2_g = ln2_g_ref[0]
    ln2_b = ln2_b_ref[0]
    bo = bo_ref[0]
    b1 = b1_ref[0]
    b2 = b2_ref[0]
    wqkv = wqkv_ref[0]                                   # (D, 3*ATTN_INNER) bf16
    wo = wo_ref[0]                                       # (ATTN_INNER, D)   bf16
    w1 = w1_ref[0]                                       # (D, FF_INNER)     bf16
    w2 = w2_ref[0]                                       # (FF_INNER, D)     bf16

    # ---- self attention (pre-norm) ----
    xn = _layernorm(x, ln1_g, ln1_b).astype(jnp.bfloat16)
    qkv = jnp.dot(xn, wqkv, preferred_element_type=jnp.float32)   # (S, 3*inner)
    q = qkv[:, 0 * ATTN_INNER:1 * ATTN_INNER]
    k = qkv[:, 1 * ATTN_INNER:2 * ATTN_INNER]
    v = qkv[:, 2 * ATTN_INNER:3 * ATTN_INNER]

    heads = []
    for h in range(N_HEADS):                             # static, fully unrolled
        sl = slice(h * DIM_HEAD, (h + 1) * DIM_HEAD)
        qh = q[:, sl].astype(jnp.bfloat16)
        kh = k[:, sl].astype(jnp.bfloat16)
        vh = v[:, sl].astype(jnp.bfloat16)
        dots = jax.lax.dot_general(qh, kh, (((1,), (1,)), ((), ())),
                                   preferred_element_type=jnp.float32) * SCALE
        m = jnp.max(dots, axis=-1, keepdims=True)
        p = jnp.exp(dots - m)
        p = p * pl.reciprocal(jnp.sum(p, axis=-1, keepdims=True), approx=True)
        heads.append(jnp.dot(p.astype(jnp.bfloat16), vh,
                             preferred_element_type=jnp.float32))
    attn = jnp.concatenate(heads, axis=-1).astype(jnp.bfloat16)    # (S, inner)
    x = x + jnp.dot(attn, wo, preferred_element_type=jnp.float32) + bo

    # ---- feed forward (pre-norm) ----
    xn2 = _layernorm(x, ln2_g, ln2_b).astype(jnp.bfloat16)
    h1 = jnp.dot(xn2, w1, preferred_element_type=jnp.float32) + b1
    # TODO(synk): x-transformers uses exact (erf) GELU; tanh approximation used here.
    h1 = jax.nn.gelu(h1, approximate=True).astype(jnp.bfloat16)
    x = x + jnp.dot(h1, w2, preferred_element_type=jnp.float32) + b2

    carry_ref[...] = x

    @pl.when(layer == pl.num_programs(1) - 1)
    def _finalize():
        o_ref[0] = _layernorm(x, fg_ref[...], fb_ref[...])


def _stack_call(x, p):
    B, S, D = x.shape

    def xmap(b, l):
        return (b, 0, 0)

    def wmap(b, l):
        return (l, 0, 0)

    def fmap(b, l):
        return (0, 0)

    in_specs = [
        pl.BlockSpec((1, S, D), xmap),                      # x (layer-0 carry init)
        pl.BlockSpec((1, 1, D), wmap),                      # ln1_g
        pl.BlockSpec((1, 1, D), wmap),                      # ln1_b
        pl.BlockSpec((1, D, 3 * ATTN_INNER), wmap),         # wqkv
        pl.BlockSpec((1, ATTN_INNER, D), wmap),             # wo
        pl.BlockSpec((1, 1, D), wmap),                      # bo
        pl.BlockSpec((1, 1, D), wmap),                      # ln2_g
        pl.BlockSpec((1, 1, D), wmap),                      # ln2_b
        pl.BlockSpec((1, D, FF_INNER), wmap),               # w1
        pl.BlockSpec((1, 1, FF_INNER), wmap),               # b1
        pl.BlockSpec((1, FF_INNER, D), wmap),               # w2
        pl.BlockSpec((1, 1, D), wmap),                      # b2
        pl.BlockSpec((1, D), fmap),                         # final_g
        pl.BlockSpec((1, D), fmap),                         # final_b
    ]
    return pl.pallas_call(
        bert_stack_kernel,
        out_shape=jax.ShapeDtypeStruct((B, S, D), jnp.float32),
        grid=(B, N_LAYER),
        in_specs=in_specs,
        out_specs=pl.BlockSpec((1, S, D), xmap),
        scratch_shapes=[pltpu.VMEM((S, D), jnp.float32)],   # residual-stream carry
        compiler_params=pltpu.CompilerParams(
            dimension_semantics=("parallel", "arbitrary")),
    )(x, p['ln1_g'], p['ln1_b'], p['wqkv'], p['wo'], p['bo'],
      p['ln2_g'], p['ln2_b'], p['w1'], p['b1'], p['w2'], p['b2'],
      p['final_g'], p['final_b'])


@jax.jit
def bert_embedder_forward(tokens, params):
    """tokens: (B, S) int32 ids -> (B, S, N_EMBED) float32 embeddings."""
    # Glue (XLA): token + learned absolute positional embedding (emb_dropout=0).
    x = jnp.take(params['token_emb'], tokens, axis=0)       # (B, S, D)
    x = x + params['pos_emb'][None, :tokens.shape[1], :]
    return _stack_call(x, params)


def init_params(key):
    def nrm(k, shape, dtype=jnp.bfloat16, std=0.02):
        return (std * jax.random.normal(k, shape, dtype=jnp.float32)).astype(dtype)

    ks = jax.random.split(key, 6)
    return {
        'token_emb': nrm(ks[0], (VOCAB_SIZE, N_EMBED), jnp.float32),
        'pos_emb':   nrm(ks[1], (MAX_SEQ_LEN, N_EMBED), jnp.float32),
        # per-layer weights stacked along a leading layer axis (bf16 matmul weights)
        'ln1_g': jnp.ones((N_LAYER, 1, N_EMBED), jnp.float32),
        'ln1_b': jnp.zeros((N_LAYER, 1, N_EMBED), jnp.float32),
        'wqkv':  nrm(ks[2], (N_LAYER, N_EMBED, 3 * ATTN_INNER)),
        'wo':    nrm(ks[3], (N_LAYER, ATTN_INNER, N_EMBED)),
        'bo':    jnp.zeros((N_LAYER, 1, N_EMBED), jnp.float32),
        'ln2_g': jnp.ones((N_LAYER, 1, N_EMBED), jnp.float32),
        'ln2_b': jnp.zeros((N_LAYER, 1, N_EMBED), jnp.float32),
        'w1':    nrm(ks[4], (N_LAYER, N_EMBED, FF_INNER)),
        'b1':    jnp.zeros((N_LAYER, 1, FF_INNER), jnp.float32),
        'w2':    nrm(ks[5], (N_LAYER, FF_INNER, N_EMBED)),
        'b2':    jnp.zeros((N_LAYER, 1, N_EMBED), jnp.float32),
        'final_g': jnp.ones((1, N_EMBED), jnp.float32),
        'final_b': jnp.zeros((1, N_EMBED), jnp.float32),
    }


if __name__ == "__main__":
    key = jax.random.PRNGKey(0)
    pkey, tkey = jax.random.split(key)
    params = init_params(pkey)
    # use_tokenizer=False path: integer token ids in [0, VOCAB_SIZE)
    tokens = jax.random.randint(tkey, (BATCH, MAX_SEQ_LEN), 0, VOCAB_SIZE,
                                dtype=jnp.int32)
    z = bert_embedder_forward(tokens, params)
    jax.block_until_ready(z)
    assert z.shape == (BATCH, MAX_SEQ_LEN, N_EMBED) and z.dtype == jnp.float32
    print("KERNEL_OK")
</pallas_src>

<mosaic_0001>
module attributes {stable_mosaic.version = 11 : i64} {
  func.func @bert_stack_kernel(%arg0: i32, %arg1: i32, %arg2: memref<1x8x128xf32, #tpu.memory_space<vmem>>, %arg3: memref<1x1x128xf32, #tpu.memory_space<vmem>>, %arg4: memref<1x1x128xf32, #tpu.memory_space<vmem>>, %arg5: memref<1x128x384xbf16, #tpu.memory_space<vmem>>, %arg6: memref<1x128x128xbf16, #tpu.memory_space<vmem>>, %arg7: memref<1x1x128xf32, #tpu.memory_space<vmem>>, %arg8: memref<1x1x128xf32, #tpu.memory_space<vmem>>, %arg9: memref<1x1x128xf32, #tpu.memory_space<vmem>>, %arg10: memref<1x128x512xbf16, #tpu.memory_space<vmem>>, %arg11: memref<1x1x512xf32, #tpu.memory_space<vmem>>, %arg12: memref<1x512x128xbf16, #tpu.memory_space<vmem>>, %arg13: memref<1x1x128xf32, #tpu.memory_space<vmem>>, %arg14: memref<1x128xf32, #tpu.memory_space<vmem>>, %arg15: memref<1x128xf32, #tpu.memory_space<vmem>>, %arg16: memref<1x8x128xf32, #tpu.memory_space<vmem>>, %arg17: memref<8x128xf32, #tpu.memory_space<vmem>>) attributes {dimension_semantics = [#tpu.dimension_semantics<parallel>, #tpu.dimension_semantics<arbitrary>], iteration_bounds = array<i64: 2, 2>, scalar_prefetch = 0 : i64, scratch_operands = 1 : i64, tpu.core_type = #tpu.core_type<tc>, window_params = [{transform_indices = @transform_0, window_bounds = array<i64: 1, 8, 128>}, {transform_indices = @transform_1, window_bounds = array<i64: 1, 1, 128>}, {transform_indices = @transform_2, window_bounds = array<i64: 1, 1, 128>}, {transform_indices = @transform_3, window_bounds = array<i64: 1, 128, 384>}, {transform_indices = @transform_4, window_bounds = array<i64: 1, 128, 128>}, {transform_indices = @transform_5, window_bounds = array<i64: 1, 1, 128>}, {transform_indices = @transform_6, window_bounds = array<i64: 1, 1, 128>}, {transform_indices = @transform_7, window_bounds = array<i64: 1, 1, 128>}, {transform_indices = @transform_8, window_bounds = array<i64: 1, 128, 512>}, {transform_indices = @transform_9, window_bounds = array<i64: 1, 1, 512>}, {transform_indices = @transform_10, window_bounds = array<i64: 1, 512, 128>}, {transform_indices = @transform_11, window_bounds = array<i64: 1, 1, 128>}, {pipeline_mode = #tpu.pipeline_mode<synchronous>, transform_indices = @transform_12, window_bounds = array<i64: 1, 128>}, {pipeline_mode = #tpu.pipeline_mode<synchronous>, transform_indices = @transform_13, window_bounds = array<i64: 1, 128>}, {transform_indices = @transform_14, window_bounds = array<i64: 1, 8, 128>}]} {
    %c0_i32 = arith.constant 0 : i32
    %0 = arith.cmpi eq, %arg1, %c0_i32 : i32
    %1 = arith.extui %0 : i1 to i32
    %c0_i32_0 = arith.constant 0 : i32
    %2 = arith.cmpi ne, %1, %c0_i32_0 : i32
    scf.if %2 {
      %c0_65 = arith.constant 0 : index
      %c0_66 = arith.constant 0 : index
      %c0_67 = arith.constant 0 : index
      %149 = vector.load %arg2[%c0_65, %c0_66, %c0_67] : memref<1x8x128xf32, #tpu.memory_space<vmem>>, vector<1x8x128xf32>
      %150 = vector.shape_cast %149 : vector<1x8x128xf32> to vector<8x128xf32>
      %c0_68 = arith.constant 0 : index
      %c0_69 = arith.constant 0 : index
      %151 = vector.load %arg17[%c0_68, %c0_69] : memref<8x128xf32, #tpu.memory_space<vmem>>, vector<8x128xf32>
      tpu.vector_store %arg17[%c0_68, %c0_69], %150 {strides = array<i32>} : memref<8x128xf32, #tpu.memory_space<vmem>>, vector<8x128xf32>,
    } else {
    }
    %c0 = arith.constant 0 : index
    %c0_1 = arith.constant 0 : index
    %3 = vector.load %arg17[%c0, %c0_1] : memref<8x128xf32, #tpu.memory_space<vmem>>, vector<8x128xf32>
    %c0_2 = arith.constant 0 : index
    %c0_3 = arith.constant 0 : index
    %c0_4 = arith.constant 0 : index
    %4 = vector.load %arg3[%c0_2, %c0_3, %c0_4] : memref<1x1x128xf32, #tpu.memory_space<vmem>>, vector<1x1x128xf32>
    %5 = vector.shape_cast %4 : vector<1x1x128xf32> to vector<1x128xf32>
    %c0_5 = arith.constant 0 : index
    %c0_6 = arith.constant 0 : index
    %c0_7 = arith.constant 0 : index
    %6 = vector.load %arg4[%c0_5, %c0_6, %c0_7] : memref<1x1x128xf32, #tpu.memory_space<vmem>>, vector<1x1x128xf32>
    %7 = vector.shape_cast %6 : vector<1x1x128xf32> to vector<1x128xf32>
    %c0_8 = arith.constant 0 : index
    %c0_9 = arith.constant 0 : index
    %c0_10 = arith.constant 0 : index
    %8 = vector.load %arg8[%c0_8, %c0_9, %c0_10] : memref<1x1x128xf32, #tpu.memory_space<vmem>>, vector<1x1x128xf32>
    %9 = vector.shape_cast %8 : vector<1x1x128xf32> to vector<1x128xf32>
    %c0_11 = arith.constant 0 : index
    %c0_12 = arith.constant 0 : index
    %c0_13 = arith.constant 0 : index
    %10 = vector.load %arg9[%c0_11, %c0_12, %c0_13] : memref<1x1x128xf32, #tpu.memory_space<vmem>>, vector<1x1x128xf32>
    %11 = vector.shape_cast %10 : vector<1x1x128xf32> to vector<1x128xf32>
    %c0_14 = arith.constant 0 : index
    %c0_15 = arith.constant 0 : index
    %c0_16 = arith.constant 0 : index
    %12 = vector.load %arg7[%c0_14, %c0_15, %c0_16] : memref<1x1x128xf32, #tpu.memory_space<vmem>>, vector<1x1x128xf32>
    %13 = vector.shape_cast %12 : vector<1x1x128xf32> to vector<1x128xf32>
    %c0_17 = arith.constant 0 : index
    %c0_18 = arith.constant 0 : index
    %c0_19 = arith.constant 0 : index
    %14 = vector.load %arg11[%c0_17, %c0_18, %c0_19] : memref<1x1x512xf32, #tpu.memory_space<vmem>>, vector<1x1x512xf32>
    %15 = vector.shape_cast %14 : vector<1x1x512xf32> to vector<1x512xf32>
    %c0_20 = arith.constant 0 : index
    %c0_21 = arith.constant 0 : index
    %c0_22 = arith.constant 0 : index
    %16 = vector.load %arg13[%c0_20, %c0_21, %c0_22] : memref<1x1x128xf32, #tpu.memory_space<vmem>>, vector<1x1x128xf32>
    %17 = vector.shape_cast %16 : vector<1x1x128xf32> to vector<1x128xf32>
    %c0_23 = arith.constant 0 : index
    %c0_24 = arith.constant 0 : index
    %c0_25 = arith.constant 0 : index
    %18 = vector.load %arg5[%c0_23, %c0_24, %c0_25] : memref<1x128x384xbf16, #tpu.memory_space<vmem>>, vector<1x128x384xbf16>
    %19 = vector.shape_cast %18 : vector<1x128x384xbf16> to vector<128x384xbf16>
    %c0_26 = arith.constant 0 : index
    %c0_27 = arith.constant 0 : index
    %c0_28 = arith.constant 0 : index
    %20 = vector.load %arg6[%c0_26, %c0_27, %c0_28] : memref<1x128x128xbf16, #tpu.memory_space<vmem>>, vector<1x128x128xbf16>
    %21 = vector.shape_cast %20 : vector<1x128x128xbf16> to vector<128x128xbf16>
    %c0_29 = arith.constant 0 : index
    %c0_30 = arith.constant 0 : index
    %c0_31 = arith.constant 0 : index
    %22 = vector.load %arg10[%c0_29, %c0_30, %c0_31] : memref<1x128x512xbf16, #tpu.memory_space<vmem>>, vector<1x128x512xbf16>
    %23 = vector.shape_cast %22 : vector<1x128x512xbf16> to vector<128x512xbf16>
    %c0_32 = arith.constant 0 : index
    %c0_33 = arith.constant 0 : index
    %c0_34 = arith.constant 0 : index
    %24 = vector.load %arg12[%c0_32, %c0_33, %c0_34] : memref<1x512x128xbf16, #tpu.memory_space<vmem>>, vector<1x512x128xbf16>
    %25 = vector.shape_cast %24 : vector<1x512x128xbf16> to vector<512x128xbf16>
    %cst = arith.constant dense<0.000000e+00> : vector<8xf32>
    %26 = vector.multi_reduction <add>, %3, %cst [1] : vector<8x128xf32> to vector<8xf32>
    %27 = vector.shape_cast %26 : vector<8xf32> to vector<8x1xf32>
    %cst_35 = arith.constant 1.280000e+02 : f32
    %28 = vector.broadcast %cst_35 : f32 to vector<8x1xf32>
    %29 = arith.divf %27, %28 : vector<8x1xf32>
    %30 = vector.broadcast %29 : vector<8x1xf32> to vector<8x128xf32>
    %31 = arith.subf %3, %30 : vector<8x128xf32>
    %32 = arith.mulf %31, %31 : vector<8x128xf32>
    %cst_36 = arith.constant dense<0.000000e+00> : vector<8xf32>
    %33 = vector.multi_reduction <add>, %32, %cst_36 [1] : vector<8x128xf32> to vector<8xf32>
    %34 = vector.shape_cast %33 : vector<8xf32> to vector<8x1xf32>
    %cst_37 = arith.constant 1.280000e+02 : f32
    %35 = vector.broadcast %cst_37 : f32 to vector<8x1xf32>
    %36 = arith.divf %34, %35 : vector<8x1xf32>
    %37 = vector.broadcast %29 : vector<8x1xf32> to vector<8x128xf32>
    %38 = arith.subf %3, %37 : vector<8x128xf32>
    %cst_38 = arith.constant 9.99999974E-6 : f32
    %39 = vector.broadcast %cst_38 : f32 to vector<8x1xf32>
    %40 = arith.addf %36, %39 : vector<8x1xf32>
    %41 = math.rsqrt %40 : vector<8x1xf32>
    %42 = vector.broadcast %41 : vector<8x1xf32> to vector<8x128xf32>
    %43 = arith.mulf %38, %42 : vector<8x128xf32>
    %44 = vector.broadcast %5 : vector<1x128xf32> to vector<8x128xf32>
    %45 = arith.mulf %43, %44 : vector<8x128xf32>
    %46 = vector.broadcast %7 : vector<1x128xf32> to vector<8x128xf32>
    %47 = arith.addf %45, %46 : vector<8x128xf32>
    %48 = arith.truncf %47 : vector<8x128xf32> to vector<8x128xbf16>
    %cst_39 = arith.constant dense<0.000000e+00> : vector<8x384xf32>
    %49 = tpu.matmul %48, %19, %cst_39 {dimension_numbers = #tpu.dot_dimension_numbers<[1], [0], [0], [1], [0, 0, 1, 1], [], []>} : vector<8x128xbf16>, vector<128x384xbf16>, vector<8x384xf32> -> vector<8x384xf32>
    %50 = vector.extract_strided_slice %49 {offsets = [0, 0], sizes = [8, 128], strides = [1, 1]} : vector<8x384xf32> to vector<8x128xf32>
    %51 = vector.extract_strided_slice %49 {offsets = [0, 128], sizes = [8, 128], strides = [1, 1]} : vector<8x384xf32> to vector<8x128xf32>
    %52 = vector.extract_strided_slice %49 {offsets = [0, 256], sizes = [8, 128], strides = [1, 1]} : vector<8x384xf32> to vector<8x128xf32>
    %53 = vector.extract_strided_slice %50 {offsets = [0, 0], sizes = [8, 64], strides = [1, 1]} : vector<8x128xf32> to vector<8x64xf32>
    %54 = arith.truncf %53 : vector<8x64xf32> to vector<8x64xbf16>
    %55 = vector.extract_strided_slice %51 {offsets = [0, 0], sizes = [8, 64], strides = [1, 1]} : vector<8x128xf32> to vector<8x64xf32>
    %56 = arith.truncf %55 : vector<8x64xf32> to vector<8x64xbf16>
    %57 = vector.extract_strided_slice %52 {offsets = [0, 0], sizes = [8, 64], strides = [1, 1]} : vector<8x128xf32> to vector<8x64xf32>
    %58 = arith.truncf %57 : vector<8x64xf32> to vector<8x64xbf16>
    %cst_40 = arith.constant dense<0.000000e+00> : vector<8x8xf32>
    %59 = tpu.matmul %54, %56, %cst_40 {dimension_numbers = #tpu.dot_dimension_numbers<[1], [1], [0], [0], [0, 0, 1, 0], [], []>} : vector<8x64xbf16>, vector<8x64xbf16>, vector<8x8xf32> -> vector<8x8xf32>
    %cst_41 = arith.constant 1.250000e-01 : f32
    %60 = vector.broadcast %cst_41 : f32 to vector<8x8xf32>
    %61 = arith.mulf %59, %60 : vector<8x8xf32>
    %cst_42 = arith.constant dense<0xFF800000> : vector<8xf32>
    %62 = vector.multi_reduction <maximumf>, %61, %cst_42 [1] : vector<8x8xf32> to vector<8xf32>
    %63 = vector.shape_cast %62 : vector<8xf32> to vector<8x1xf32>
    %64 = vector.broadcast %63 : vector<8x1xf32> to vector<8x8xf32>
    %65 = arith.subf %61, %64 : vector<8x8xf32>
    %66 = math.exp %65 : vector<8x8xf32>
    %cst_43 = arith.constant dense<0.000000e+00> : vector<8xf32>
    %67 = vector.multi_reduction <add>, %66, %cst_43 [1] : vector<8x8xf32> to vector<8xf32>
    %68 = vector.shape_cast %67 : vector<8xf32> to vector<8x1xf32>
    %69 = tpu.reciprocal %68 {approx = true} : vector<8x1xf32> -> vector<8x1xf32>
    %70 = vector.broadcast %69 : vector<8x1xf32> to vector<8x8xf32>
    %71 = arith.mulf %66, %70 : vector<8x8xf32>
    %72 = arith.truncf %71 : vector<8x8xf32> to vector<8x8xbf16>
    %cst_44 = arith.constant dense<0.000000e+00> : vector<8x64xf32>
    %73 = tpu.matmul %72, %58, %cst_44 {dimension_numbers = #tpu.dot_dimension_numbers<[1], [0], [0], [1], [0, 0, 1, 1], [], []>} : vector<8x8xbf16>, vector<8x64xbf16>, vector<8x64xf32> -> vector<8x64xf32>
    %74 = vector.extract_strided_slice %50 {offsets = [0, 64], sizes = [8, 64], strides = [1, 1]} : vector<8x128xf32> to vector<8x64xf32>
    %75 = arith.truncf %74 : vector<8x64xf32> to vector<8x64xbf16>
    %76 = vector.extract_strided_slice %51 {offsets = [0, 64], sizes = [8, 64], strides = [1, 1]} : vector<8x128xf32> to vector<8x64xf32>
    %77 = arith.truncf %76 : vector<8x64xf32> to vector<8x64xbf16>
    %78 = vector.extract_strided_slice %52 {offsets = [0, 64], sizes = [8, 64], strides = [1, 1]} : vector<8x128xf32> to vector<8x64xf32>
    %79 = arith.truncf %78 : vector<8x64xf32> to vector<8x64xbf16>
    %cst_45 = arith.constant dense<0.000000e+00> : vector<8x8xf32>
    %80 = tpu.matmul %75, %77, %cst_45 {dimension_numbers = #tpu.dot_dimension_numbers<[1], [1], [0], [0], [0, 0, 1, 0], [], []>} : vector<8x64xbf16>, vector<8x64xbf16>, vector<8x8xf32> -> vector<8x8xf32>
    %cst_46 = arith.constant 1.250000e-01 : f32
    %81 = vector.broadcast %cst_46 : f32 to vector<8x8xf32>
    %82 = arith.mulf %80, %81 : vector<8x8xf32>
    %cst_47 = arith.constant dense<0xFF800000> : vector<8xf32>
    %83 = vector.multi_reduction <maximumf>, %82, %cst_47 [1] : vector<8x8xf32> to vector<8xf32>
    %84 = vector.shape_cast %83 : vector<8xf32> to vector<8x1xf32>
    %85 = vector.broadcast %84 : vector<8x1xf32> to vector<8x8xf32>
    %86 = arith.subf %82, %85 : vector<8x8xf32>
    %87 = math.exp %86 : vector<8x8xf32>
    %cst_48 = arith.constant dense<0.000000e+00> : vector<8xf32>
    %88 = vector.multi_reduction <add>, %87, %cst_48 [1] : vector<8x8xf32> to vector<8xf32>
    %89 = vector.shape_cast %88 : vector<8xf32> to vector<8x1xf32>
    %90 = tpu.reciprocal %89 {approx = true} : vector<8x1xf32> -> vector<8x1xf32>
    %91 = vector.broadcast %90 : vector<8x1xf32> to vector<8x8xf32>
    %92 = arith.mulf %87, %91 : vector<8x8xf32>
    %93 = arith.truncf %92 : vector<8x8xf32> to vector<8x8xbf16>
    %cst_49 = arith.constant dense<0.000000e+00> : vector<8x64xf32>
    %94 = tpu.matmul %93, %79, %cst_49 {dimension_numbers = #tpu.dot_dimension_numbers<[1], [0], [0], [1], [0, 0, 1, 1], [], []>} : vector<8x8xbf16>, vector<8x64xbf16>, vector<8x64xf32> -> vector<8x64xf32>
    %95 = tpu.concatenate %73, %94 in 1 : vector<8x64xf32>, vector<8x64xf32> -> vector<8x128xf32>
    %96 = arith.truncf %95 : vector<8x128xf32> to vector<8x128xbf16>
    %cst_50 = arith.constant dense<0.000000e+00> : vector<8x128xf32>
    %97 = tpu.matmul %96, %21, %cst_50 {dimension_numbers = #tpu.dot_dimension_numbers<[1], [0], [0], [1], [0, 0, 1, 1], [], []>} : vector<8x128xbf16>, vector<128x128xbf16>, vector<8x128xf32> -> vector<8x128xf32>
    %98 = arith.addf %3, %97 : vector<8x128xf32>
    %99 = vector.broadcast %13 : vector<1x128xf32> to vector<8x128xf32>
    %100 = arith.addf %98, %99 : vector<8x128xf32>
    %cst_51 = arith.constant dense<0.000000e+00> : vector<8xf32>
    %101 = vector.multi_reduction <add>, %100, %cst_51 [1] : vector<8x128xf32> to vector<8xf32>
    %102 = vector.shape_cast %101 : vector<8xf32> to vector<8x1xf32>
    %cst_52 = arith.constant 1.280000e+02 : f32
    %103 = vector.broadcast %cst_52 : f32 to vector<8x1xf32>
    %104 = arith.divf %102, %103 : vector<8x1xf32>
    %105 = vector.broadcast %104 : vector<8x1xf32> to vector<8x128xf32>
    %106 = arith.subf %100, %105 : vector<8x128xf32>
    %107 = arith.mulf %106, %106 : vector<8x128xf32>
    %cst_53 = arith.constant dense<0.000000e+00> : vector<8xf32>
    %108 = vector.multi_reduction <add>, %107, %cst_53 [1] : vector<8x128xf32> to vector<8xf32>
    %109 = vector.shape_cast %108 : vector<8xf32> to vector<8x1xf32>
    %cst_54 = arith.constant 1.280000e+02 : f32
    %110 = vector.broadcast %cst_54 : f32 to vector<8x1xf32>
    %111 = arith.divf %109, %110 : vector<8x1xf32>
    %112 = vector.broadcast %104 : vector<8x1xf32> to vector<8x128xf32>
    %113 = arith.subf %100, %112 : vector<8x128xf32>
    %cst_55 = arith.constant 9.99999974E-6 : f32
    %114 = vector.broadcast %cst_55 : f32 to vector<8x1xf32>
    %115 = arith.addf %111, %114 : vector<8x1xf32>
    %116 = math.rsqrt %115 : vector<8x1xf32>
    %117 = vector.broadcast %116 : vector<8x1xf32> to vector<8x128xf32>
    %118 = arith.mulf %113, %117 : vector<8x128xf32>
    %119 = vector.broadcast %9 : vector<1x128xf32> to vector<8x128xf32>
    %120 = arith.mulf %118, %119 : vector<8x128xf32>
    %121 = vector.broadcast %11 : vector<1x128xf32> to vector<8x128xf32>
    %122 = arith.addf %120, %121 : vector<8x128xf32>
    %123 = arith.truncf %122 : vector<8x128xf32> to vector<8x128xbf16>
    %cst_56 = arith.constant dense<0.000000e+00> : vector<8x512xf32>
    %124 = tpu.matmul %123, %23, %cst_56 {dimension_numbers = #tpu.dot_dimension_numbers<[1], [0], [0], [1], [0, 0, 1, 1], [], []>} : vector<8x128xbf16>, vector<128x512xbf16>, vector<8x512xf32> -> vector<8x512xf32>
    %125 = vector.broadcast %15 : vector<1x512xf32> to vector<8x512xf32>
    %126 = arith.addf %124, %125 : vector<8x512xf32>
    %127 = arith.mulf %126, %126 : vector<8x512xf32>
    %128 = arith.mulf %126, %127 : vector<8x512xf32>
    %cst_57 = arith.constant 4.471500e-02 : f32
    %129 = vector.broadcast %cst_57 : f32 to vector<8x512xf32>
    %130 = arith.mulf %129, %128 : vector<8x512xf32>
    %131 = arith.addf %126, %130 : vector<8x512xf32>
    %cst_58 = arith.constant 0.797884583 : f32
    %132 = vector.broadcast %cst_58 : f32 to vector<8x512xf32>
    %133 = arith.mulf %132, %131 : vector<8x512xf32>
    %134 = math.tanh %133 : vector<8x512xf32>
    %cst_59 = arith.constant 1.000000e+00 : f32
    %135 = vector.broadcast %cst_59 : f32 to vector<8x512xf32>
    %136 = arith.addf %135, %134 : vector<8x512xf32>
    %cst_60 = arith.constant 5.000000e-01 : f32
    %137 = vector.broadcast %cst_60 : f32 to vector<8x512xf32>
    %138 = arith.mulf %137, %136 : vector<8x512xf32>
    %139 = arith.mulf %126, %138 : vector<8x512xf32>
    %140 = arith.truncf %139 : vector<8x512xf32> to vector<8x512xbf16>
    %cst_61 = arith.constant dense<0.000000e+00> : vector<8x128xf32>
    %141 = tpu.matmul %140, %25, %cst_61 {dimension_numbers = #tpu.dot_dimension_numbers<[1], [0], [0], [1], [0, 0, 1, 1], [], []>} : vector<8x512xbf16>, vector<512x128xbf16>, vector<8x128xf32> -> vector<8x128xf32>
    %142 = arith.addf %100, %141 : vector<8x128xf32>
    %143 = vector.broadcast %17 : vector<1x128xf32> to vector<8x128xf32>
    %144 = arith.addf %142, %143 : vector<8x128xf32>
    %c0_62 = arith.constant 0 : index
    %c0_63 = arith.constant 0 : index
    %145 = vector.load %arg17[%c0_62, %c0_63] : memref<8x128xf32, #tpu.memory_space<vmem>>, vector<8x128xf32>
    tpu.vector_store %arg17[%c0_62, %c0_63], %144 {strides = array<i32>} : memref<8x128xf32, #tpu.memory_space<vmem>>, vector<8x128xf32>,
    %c1_i32 = arith.constant 1 : i32
    %146 = arith.cmpi eq, %arg1, %c1_i32 : i32
    %147 = arith.extui %146 : i1 to i32
    %c0_i32_64 = arith.constant 0 : i32
    %148 = arith.cmpi ne, %147, %c0_i32_64 : i32
    scf.if %148 {
      %c0_65 = arith.constant 0 : index
      %c0_66 = arith.constant 0 : index
      %149 = vector.load %arg14[%c0_65, %c0_66] : memref<1x128xf32, #tpu.memory_space<vmem>>, vector<1x128xf32>
      %c0_67 = arith.constant 0 : index
      %c0_68 = arith.constant 0 : index
      %150 = vector.load %arg15[%c0_67, %c0_68] : memref<1x128xf32, #tpu.memory_space<vmem>>, vector<1x128xf32>
      %cst_69 = arith.constant dense<0.000000e+00> : vector<8xf32>
      %151 = vector.multi_reduction <add>, %144, %cst_69 [1] : vector<8x128xf32> to vector<8xf32>
      %152 = vector.shape_cast %151 : vector<8xf32> to vector<8x1xf32>
      %cst_70 = arith.constant 1.280000e+02 : f32
      %153 = vector.broadcast %cst_70 : f32 to vector<8x1xf32>
      %154 = arith.divf %152, %153 : vector<8x1xf32>
      %155 = vector.broadcast %154 : vector<8x1xf32> to vector<8x128xf32>
      %156 = arith.subf %144, %155 : vector<8x128xf32>
      %157 = arith.mulf %156, %156 : vector<8x128xf32>
      %cst_71 = arith.constant dense<0.000000e+00> : vector<8xf32>
      %158 = vector.multi_reduction <add>, %157, %cst_71 [1] : vector<8x128xf32> to vector<8xf32>
      %159 = vector.shape_cast %158 : vector<8xf32> to vector<8x1xf32>
      %cst_72 = arith.constant 1.280000e+02 : f32
      %160 = vector.broadcast %cst_72 : f32 to vector<8x1xf32>
      %161 = arith.divf %159, %160 : vector<8x1xf32>
      %162 = vector.broadcast %154 : vector<8x1xf32> to vector<8x128xf32>
      %163 = arith.subf %144, %162 : vector<8x128xf32>
      %cst_73 = arith.constant 9.99999974E-6 : f32
      %164 = vector.broadcast %cst_73 : f32 to vector<8x1xf32>
      %165 = arith.addf %161, %164 : vector<8x1xf32>
      %166 = math.rsqrt %165 : vector<8x1xf32>
      %167 = vector.broadcast %166 : vector<8x1xf32> to vector<8x128xf32>
      %168 = arith.mulf %163, %167 : vector<8x128xf32>
      %169 = vector.broadcast %149 : vector<1x128xf32> to vector<8x128xf32>
      %170 = arith.mulf %168, %169 : vector<8x128xf32>
      %171 = vector.broadcast %150 : vector<1x128xf32> to vector<8x128xf32>
      %172 = arith.addf %170, %171 : vector<8x128xf32>
      %c0_74 = arith.constant 0 : index
      %c0_75 = arith.constant 0 : index
      %c0_76 = arith.constant 0 : index
      %173 = vector.load %arg16[%c0_74, %c0_75, %c0_76] : memref<1x8x128xf32, #tpu.memory_space<vmem>>, vector<1x8x128xf32>
      %174 = vector.shape_cast %173 : vector<1x8x128xf32> to vector<8x128xf32>
      %175 = vector.shape_cast %172 : vector<8x128xf32> to vector<1x8x128xf32>
      tpu.vector_store %arg16[%c0_74, %c0_75, %c0_76], %175 {strides = array<i32>} : memref<1x8x128xf32, #tpu.memory_space<vmem>>, vector<1x8x128xf32>,
    } else {
    }
    return
  }
  func.func @transform_0(%arg0: i32, %arg1: i32) -> (i32, i32, i32) {
    %c0_i32 = arith.constant 0 : i32
    %c0_i32_0 = arith.constant 0 : i32
    %c0_i32_1 = arith.constant 0 : i32
    return %arg0, %c0_i32, %c0_i32_0 : i32, i32, i32
  }
  func.func @transform_1(%arg0: i32, %arg1: i32) -> (i32, i32, i32) {
    %c0_i32 = arith.constant 0 : i32
    %c0_i32_0 = arith.constant 0 : i32
    %c0_i32_1 = arith.constant 0 : i32
    return %arg1, %c0_i32, %c0_i32_0 : i32, i32, i32
  }
  func.func @transform_2(%arg0: i32, %arg1: i32) -> (i32, i32, i32) {
    %c0_i32 = arith.constant 0 : i32
    %c0_i32_0 = arith.constant 0 : i32
    %c0_i32_1 = arith.constant 0 : i32
    return %arg1, %c0_i32, %c0_i32_0 : i32, i32, i32
  }
  func.func @transform_3(%arg0: i32, %arg1: i32) -> (i32, i32, i32) {
    %c0_i32 = arith.constant 0 : i32
    %c0_i32_0 = arith.constant 0 : i32
    %c0_i32_1 = arith.constant 0 : i32
    return %arg1, %c0_i32, %c0_i32_0 : i32, i32, i32
  }
  func.func @transform_4(%arg0: i32, %arg1: i32) -> (i32, i32, i32) {
    %c0_i32 = arith.constant 0 : i32
    %c0_i32_0 = arith.constant 0 : i32
    %c0_i32_1 = arith.constant 0 : i32
    return %arg1, %c0_i32, %c0_i32_0 : i32, i32, i32
  }
  func.func @transform_5(%arg0: i32, %arg1: i32) -> (i32, i32, i32) {
    %c0_i32 = arith.constant 0 : i32
    %c0_i32_0 = arith.constant 0 : i32
    %c0_i32_1 = arith.constant 0 : i32
    return %arg1, %c0_i32, %c0_i32_0 : i32, i32, i32
  }
  func.func @transform_6(%arg0: i32, %arg1: i32) -> (i32, i32, i32) {
    %c0_i32 = arith.constant 0 : i32
    %c0_i32_0 = arith.constant 0 : i32
    %c0_i32_1 = arith.constant 0 : i32
    return %arg1, %c0_i32, %c0_i32_0 : i32, i32, i32
  }
  func.func @transform_7(%arg0: i32, %arg1: i32) -> (i32, i32, i32) {
    %c0_i32 = arith.constant 0 : i32
    %c0_i32_0 = arith.constant 0 : i32
    %c0_i32_1 = arith.constant 0 : i32
    return %arg1, %c0_i32, %c0_i32_0 : i32, i32, i32
  }
  func.func @transform_8(%arg0: i32, %arg1: i32) -> (i32, i32, i32) {
    %c0_i32 = arith.constant 0 : i32
    %c0_i32_0 = arith.constant 0 : i32
    %c0_i32_1 = arith.constant 0 : i32
    return %arg1, %c0_i32, %c0_i32_0 : i32, i32, i32
  }
  func.func @transform_9(%arg0: i32, %arg1: i32) -> (i32, i32, i32) {
    %c0_i32 = arith.constant 0 : i32
    %c0_i32_0 = arith.constant 0 : i32
    %c0_i32_1 = arith.constant 0 : i32
    return %arg1, %c0_i32, %c0_i32_0 : i32, i32, i32
  }
  func.func @transform_10(%arg0: i32, %arg1: i32) -> (i32, i32, i32) {
    %c0_i32 = arith.constant 0 : i32
    %c0_i32_0 = arith.constant 0 : i32
    %c0_i32_1 = arith.constant 0 : i32
    return %arg1, %c0_i32, %c0_i32_0 : i32, i32, i32
  }
  func.func @transform_11(%arg0: i32, %arg1: i32) -> (i32, i32, i32) {
    %c0_i32 = arith.constant 0 : i32
    %c0_i32_0 = arith.constant 0 : i32
    %c0_i32_1 = arith.constant 0 : i32
    return %arg1, %c0_i32, %c0_i32_0 : i32, i32, i32
  }
  func.func @transform_12(%arg0: i32, %arg1: i32) -> (i32, i32) {
    %c0_i32 = arith.constant 0 : i32
    %c0_i32_0 = arith.constant 0 : i32
    %c0_i32_1 = arith.constant 0 : i32
    return %c0_i32, %c0_i32_0 : i32, i32
  }
  func.func @transform_13(%arg0: i32, %arg1: i32) -> (i32, i32) {
    %c0_i32 = arith.constant 0 : i32
    %c0_i32_0 = arith.constant 0 : i32
    %c0_i32_1 = arith.constant 0 : i32
    return %c0_i32, %c0_i32_0 : i32, i32
  }
  func.func @transform_14(%arg0: i32, %arg1: i32) -> (i32, i32, i32) {
    %c0_i32 = arith.constant 0 : i32
    %c0_i32_0 = arith.constant 0 : i32
    %c0_i32_1 = arith.constant 0 : i32
    return %arg0, %c0_i32, %c0_i32_0 : i32, i32, i32
  }
}

</mosaic_0001>

<llo_original>
// kernel: bert_embedder_forward.1
$region0: #{bert_embedder_forward.1}
  #allocation0 [shape = 'u32[]', space=smem, size = 0x4, offset = 0x4, fixed_abs, tag = 'smem constant byte address 0x4 - core index']
  #allocation1 [shape = 'u32[144,128]{1,0:T(1,128)}', space=vmem, size = 0x12000, scoped, tag = 'internal scratch']
  #allocation2 [shape = 'f32[8,128]{1,0:T(8,128)}', space=vmem, size = 0x1000, scoped, tag = 'scratch operand']
  %s0 = inlined_call_operand.vmem [shape: f32[2,8,128], index: 0, kind: input, shape index: {}]
  %s1 = inlined_call_operand.vmem [shape: f32[2,1,128], index: 1, kind: input, shape index: {}]
  %s2 = inlined_call_operand.vmem [shape: f32[2,1,128], index: 2, kind: input, shape index: {}]
  %s3 = inlined_call_operand.hbm [shape: bf16[2,128,384], index: 3, kind: input, shape index: {}]
  %s4 = inlined_call_operand.vmem [shape: bf16[2,128,128], index: 4, kind: input, shape index: {}]
  %s5 = inlined_call_operand.vmem [shape: f32[2,1,128], index: 5, kind: input, shape index: {}]
  %s6 = inlined_call_operand.vmem [shape: f32[2,1,128], index: 6, kind: input, shape index: {}]
  %s7 = inlined_call_operand.vmem [shape: f32[2,1,128], index: 7, kind: input, shape index: {}]
  %s8 = inlined_call_operand.hbm [shape: bf16[2,128,512], index: 8, kind: input, shape index: {}]
  %s9 = inlined_call_operand.vmem [shape: f32[2,1,512], index: 9, kind: input, shape index: {}]
  %s10 = inlined_call_operand.hbm [shape: bf16[2,512,128], index: 10, kind: input, shape index: {}]
  %s11 = inlined_call_operand.vmem [shape: f32[2,1,128], index: 11, kind: input, shape index: {}]
  %s12 = inlined_call_operand.vmem [shape: f32[1,128], index: 12, kind: input, shape index: {}]
  %s13 = inlined_call_operand.vmem [shape: f32[1,128], index: 13, kind: input, shape index: {}]
  %s14 = inlined_call_operand.hbm [shape: f32[2,8,128], index: 14, kind: output, shape index: {}]
  %s15 = sld [smem:[#allocation0]]
  $region109: #{bert_embedder_forward.1} parent=0
    _
  %s17 = ssub.s32 1, %s15
  %s18 = scalar_select 0, %s17, %s15
  $region1: #{bert_embedder_forward.1} parent=0
    #allocation3 [shape = 'u8[196608]{0}', space=vmem, size = 0x30000, scoped, tag = 'input window, operand 3']
    #allocation4 [shape = 's32[2]{0}', space=sflag, size = 0x8, scoped, tag = 'scoped memory for bert_embedder_forward.1']
    #allocation5 [shape = 's32[2]{0}', space=sflag, size = 0x8, scoped, tag = 'scoped memory for bert_embedder_forward.1']
    #allocation6 [shape = 'u8[262144]{0}', space=vmem, size = 0x40000, scoped, tag = 'input window, operand 8']
    #allocation7 [shape = 's32[2]{0}', space=sflag, size = 0x8, scoped, tag = 'scoped memory for bert_embedder_forward.1']
    #allocation8 [shape = 'u8[262144]{0}', space=vmem, size = 0x40000, scoped, tag = 'input window, operand 10']
    #allocation9 [shape = 'u8[8192]{0}', space=vmem, size = 0x2000, scoped, tag = 'output window, operand 0']
    %19 = vsyncpa [#allocation4], 0
    %s20 = scalar_lea.sflag [#allocation4], 1
    %21 = vsyncpa %s20, 0
    %22 = vsyncpa [#allocation7], 0
    %s23 = scalar_lea.sflag [#allocation7], 1
    %24 = vsyncpa %s23, 0
    %25 = vsyncpa [#allocation5], 0
    %s26 = scalar_lea.sflag [#allocation5], 1
    %27 = vsyncpa %s26, 0
    loop: start=0, step=1, limit=6
    $region2: #{bert_embedder_forward.1} parent=1 // loop_pre_header
      _
    $region3: #{bert_embedder_forward.1} parent=1 // loop_header
      %s29 = sphi 0, %s33
      %p30 = scmp.ge.s32.totalorder %s29, 6
      %s36 = sphi 0, %s48
      %s37 = sphi 0, %s44
      %s38 = sphi 0, %s36
      %s39 = sphi 0, %s37
      %s40 = sphi 0, %s38
      %s41 = sphi 0, %s39
      %s51 = sphi 0, %s53
      %s54 = sphi 0, %s51
      %s55 = sphi 0, %s54
      %s71 = sphi 0, %s55
      %s77 = sphi 0, %s79
      %s80 = sphi 0, %s77
      %s81 = sphi 0, %s80
      %s97 = sphi 0, %s81
      %s103 = sphi 0, %s105
      %s106 = sphi 0, %s103
      %s107 = sphi 0, %s106
      %s123 = sphi 0, %s107
      %s129 = sphi 0, %s131
      %s132 = sphi 0, %s129
      %s133 = sphi 0, %s132
      %s149 = sphi 0, %s133
      %s155 = sphi 0, %s157
      %s158 = sphi 0, %s155
      %s159 = sphi 0, %s158
      %s175 = sphi 0, %s159
      %s181 = sphi 0, %s183
      %s184 = sphi 0, %s181
      %s185 = sphi 0, %s184
      %s201 = sphi 0, %s185
      %s207 = sphi 0, %s209
      %s210 = sphi 0, %s207
      %s211 = sphi 0, %s210
      %s227 = sphi 0, %s211
      %s233 = sphi 0, %s235
      %s236 = sphi 0, %s233
      %s237 = sphi 0, %s236
      %s253 = sphi 0, %s237
      %s259 = sphi 0, %s261
      %s262 = sphi 0, %s259
      %s263 = sphi 0, %s262
      %s279 = sphi 0, %s263
      %s285 = sphi 0, %s287
      %s288 = sphi 0, %s285
      %s289 = sphi 0, %s288
      %s305 = sphi 0, %s289
      %s311 = sphi 0, %s313
      %s314 = sphi 0, %s311
      %s315 = sphi 0, %s314
      %s331 = sphi 0, %s315
      %s337 = sphi 0, %s339
      %s340 = sphi 0, %s337
      %s341 = sphi 0, %s340
      %s357 = sphi 0, %s341
      %s361 = sphi 0, %s361
      %s363 = sphi 0, %s361
      %s364 = sphi 0, %s363
      %s378 = sphi 0, %s364
      %s382 = sphi 0, %s382
      %s384 = sphi 0, %s382
      %s385 = sphi 0, %s384
      %s399 = sphi 0, %s385
      %s405 = sphi 0, %s407
      %s408 = sphi 0, %s405
      %s409 = sphi 0, %s408
      %s425 = sphi 0, %s409
    $region4: #{bert_embedder_forward.1} parent=1 // loop_header_branch
      %32 = sbr.rel (%p30) target = $region8
    $region5: #{bert_embedder_forward.1} parent=1 // loop_body
      %s34 = ssub.s32 %s29, 1
      %s35 = ssub.s32 %s29, 2
      %s42 = sadd.s32 1, %s37
      %p43 = scmp.ge.s32.totalorder %s42, 2
      %s44 = scalar_select %p43, 0, %s42
      %s45 = sadd.s32 1, %s36
      %s46 = scalar_select %p43, %s45, %s36
      %p47 = scmp.ge.s32.totalorder %s46, 2
      %s48 = scalar_select %p47, 0, %s46
      %s49 = ssub.s32 %s36, %s48
      %p50 = scmp.eq.s32.totalorder %s49, 0
      %s52 = sadd.s32 %s51, 1
      %s53 = scalar_select %p50, %s51, %s52
      %p56 = pneg %p50
      %p57 = scmp.eq.s32.totalorder %s29, 3
      %p58 = por %p56, %p57
      %p59 = scmp.ne.s32.totalorder %s51, %s54
      %p60 = scmp.eq.s32.totalorder %s29, 0
      %p61 = por %p59, %p60
      %p62 = scmp.ne.s32.totalorder %s51, %s54
      %p63 = scmp.eq.s32.totalorder %s34, 3
      %p64 = por %p62, %p63
      %p65 = scmp.ne.s32.totalorder %s54, %s55
      %p66 = scmp.eq.s32.totalorder %s34, 0
      %p67 = por %p65, %p66
      %p68 = scmp.ne.s32.totalorder %s54, %s55
      %p69 = scmp.eq.s32.totalorder %s35, 3
      %p70 = por %p68, %p69
      %p72 = scmp.ne.s32.totalorder %s55, %s71
      %p73 = scmp.eq.s32.totalorder %s35, 0
      %p74 = por %p72, %p73
      %s75 = ssub.s32 %s37, %s44
      %p76 = scmp.eq.s32.totalorder %s75, 0
      %s78 = sadd.s32 %s77, 1
      %s79 = scalar_select %p76, %s77, %s78
      %p82 = pneg %p76
      %p83 = scmp.eq.s32.totalorder %s29, 3
      %p84 = por %p82, %p83
      %p85 = scmp.ne.s32.totalorder %s77, %s80
      %p86 = scmp.eq.s32.totalorder %s29, 0
      %p87 = por %p85, %p86
      %p88 = scmp.ne.s32.totalorder %s77, %s80
      %p89 = scmp.eq.s32.totalorder %s34, 3
      %p90 = por %p88, %p89
      %p91 = scmp.ne.s32.totalorder %s80, %s81
      %p92 = scmp.eq.s32.totalorder %s34, 0
      %p93 = por %p91, %p92
      %p94 = scmp.ne.s32.totalorder %s80, %s81
      %p95 = scmp.eq.s32.totalorder %s35, 3
      %p96 = por %p94, %p95
      %p98 = scmp.ne.s32.totalorder %s81, %s97
      %p99 = scmp.eq.s32.totalorder %s35, 0
      %p100 = por %p98, %p99
      %s101 = ssub.s32 %s37, %s44
      %p102 = scmp.eq.s32.totalorder %s101, 0
      %s104 = sadd.s32 %s103, 1
      %s105 = scalar_select %p102, %s103, %s104
      %p108 = pneg %p102
      %p109 = scmp.eq.s32.totalorder %s29, 3
      %p110 = por %p108, %p109
      %p111 = scmp.ne.s32.totalorder %s103, %s106
      %p112 = scmp.eq.s32.totalorder %s29, 0
      %p113 = por %p111, %p112
      %p114 = scmp.ne.s32.totalorder %s103, %s106
      %p115 = scmp.eq.s32.totalorder %s34, 3
      %p116 = por %p114, %p115
      %p117 = scmp.ne.s32.totalorder %s106, %s107
      %p118 = scmp.eq.s32.totalorder %s34, 0
      %p119 = por %p117, %p118
      %p120 = scmp.ne.s32.totalorder %s106, %s107
      %p121 = scmp.eq.s32.totalorder %s35, 3
      %p122 = por %p120, %p121
      %p124 = scmp.ne.s32.totalorder %s107, %s123
      %p125 = scmp.eq.s32.totalorder %s35, 0
      %p126 = por %p124, %p125
      %s127 = ssub.s32 %s37, %s44
      %p128 = scmp.eq.s32.totalorder %s127, 0
      %s130 = sadd.s32 %s129, 1
      %s131 = scalar_select %p128, %s129, %s130
      %p134 = pneg %p128
      %p135 = scmp.eq.s32.totalorder %s29, 3
      %p136 = por %p134, %p135
      %p137 = scmp.ne.s32.totalorder %s129, %s132
      %p138 = scmp.eq.s32.totalorder %s29, 0
      %p139 = por %p137, %p138
      %p140 = scmp.ne.s32.totalorder %s129, %s132
      %p141 = scmp.eq.s32.totalorder %s34, 3
      %p142 = por %p140, %p141
      %p143 = scmp.ne.s32.totalorder %s132, %s133
      %p144 = scmp.eq.s32.totalorder %s34, 0
      %p145 = por %p143, %p144
      %p146 = scmp.ne.s32.totalorder %s132, %s133
      %p147 = scmp.eq.s32.totalorder %s35, 3
      %p148 = por %p146, %p147
      %p150 = scmp.ne.s32.totalorder %s133, %s149
      %p151 = scmp.eq.s32.totalorder %s35, 0
      %p152 = por %p150, %p151
      %s153 = ssub.s32 %s37, %s44
      %p154 = scmp.eq.s32.totalorder %s153, 0
      %s156 = sadd.s32 %s155, 1
      %s157 = scalar_select %p154, %s155, %s156
      %p160 = pneg %p154
      %p161 = scmp.eq.s32.totalorder %s29, 3
      %p162 = por %p160, %p161
      %p163 = scmp.ne.s32.totalorder %s155, %s158
      %p164 = scmp.eq.s32.totalorder %s29, 0
      %p165 = por %p163, %p164
      %p166 = scmp.ne.s32.totalorder %s155, %s158
      %p167 = scmp.eq.s32.totalorder %s34, 3
      %p168 = por %p166, %p167
      %p169 = scmp.ne.s32.totalorder %s158, %s159
      %p170 = scmp.eq.s32.totalorder %s34, 0
      %p171 = por %p169, %p170
      %p172 = scmp.ne.s32.totalorder %s158, %s159
      %p173 = scmp.eq.s32.totalorder %s35, 3
      %p174 = por %p172, %p173
      %p176 = scmp.ne.s32.totalorder %s159, %s175
      %p177 = scmp.eq.s32.totalorder %s35, 0
      %p178 = por %p176, %p177
      %s179 = ssub.s32 %s37, %s44
      %p180 = scmp.eq.s32.totalorder %s179, 0
      %s182 = sadd.s32 %s181, 1
      %s183 = scalar_select %p180, %s181, %s182
      %p186 = pneg %p180
      %p187 = scmp.eq.s32.totalorder %s29, 3
      %p188 = por %p186, %p187
      %p189 = scmp.ne.s32.totalorder %s181, %s184
      %p190 = scmp.eq.s32.totalorder %s29, 0
      %p191 = por %p189, %p190
      %p192 = scmp.ne.s32.totalorder %s181, %s184
      %p193 = scmp.eq.s32.totalorder %s34, 3
      %p194 = por %p192, %p193
      %p195 = scmp.ne.s32.totalorder %s184, %s185
      %p196 = scmp.eq.s32.totalorder %s34, 0
      %p197 = por %p195, %p196
      %p198 = scmp.ne.s32.totalorder %s184, %s185
      %p199 = scmp.eq.s32.totalorder %s35, 3
      %p200 = por %p198, %p199
      %p202 = scmp.ne.s32.totalorder %s185, %s201
      %p203 = scmp.eq.s32.totalorder %s35, 0
      %p204 = por %p202, %p203
      %s205 = ssub.s32 %s37, %s44
      %p206 = scmp.eq.s32.totalorder %s205, 0
      %s208 = sadd.s32 %s207, 1
      %s209 = scalar_select %p206, %s207, %s208
      %p212 = pneg %p206
      %p213 = scmp.eq.s32.totalorder %s29, 3
      %p214 = por %p212, %p213
      %p215 = scmp.ne.s32.totalorder %s207, %s210
      %p216 = scmp.eq.s32.totalorder %s29, 0
      %p217 = por %p215, %p216
      %p218 = scmp.ne.s32.totalorder %s207, %s210
      %p219 = scmp.eq.s32.totalorder %s34, 3
      %p220 = por %p218, %p219
      %p221 = scmp.ne.s32.totalorder %s210, %s211
      %p222 = scmp.eq.s32.totalorder %s34, 0
      %p223 = por %p221, %p222
      %p224 = scmp.ne.s32.totalorder %s210, %s211
      %p225 = scmp.eq.s32.totalorder %s35, 3
      %p226 = por %p224, %p225
      %p228 = scmp.ne.s32.totalorder %s211, %s227
      %p229 = scmp.eq.s32.totalorder %s35, 0
      %p230 = por %p228, %p229
      %s231 = ssub.s32 %s37, %s44
      %p232 = scmp.eq.s32.totalorder %s231, 0
      %s234 = sadd.s32 %s233, 1
      %s235 = scalar_select %p232, %s233, %s234
      %p238 = pneg %p232
      %p239 = scmp.eq.s32.totalorder %s29, 3
      %p240 = por %p238, %p239
      %p241 = scmp.ne.s32.totalorder %s233, %s236
      %p242 = scmp.eq.s32.totalorder %s29, 0
      %p243 = por %p241, %p242
      %p244 = scmp.ne.s32.totalorder %s233, %s236
      %p245 = scmp.eq.s32.totalorder %s34, 3
      %p246 = por %p244, %p245
      %p247 = scmp.ne.s32.totalorder %s236, %s237
      %p248 = scmp.eq.s32.totalorder %s34, 0
      %p249 = por %p247, %p248
      %p250 = scmp.ne.s32.totalorder %s236, %s237
      %p251 = scmp.eq.s32.totalorder %s35, 3
      %p252 = por %p250, %p251
      %p254 = scmp.ne.s32.totalorder %s237, %s253
      %p255 = scmp.eq.s32.totalorder %s35, 0
      %p256 = por %p254, %p255
      %s257 = ssub.s32 %s37, %s44
      %p258 = scmp.eq.s32.totalorder %s257, 0
      %s260 = sadd.s32 %s259, 1
      %s261 = scalar_select %p258, %s259, %s260
      %p264 = pneg %p258
      %p265 = scmp.eq.s32.totalorder %s29, 3
      %p266 = por %p264, %p265
      %p267 = scmp.ne.s32.totalorder %s259, %s262
      %p268 = scmp.eq.s32.totalorder %s29, 0
      %p269 = por %p267, %p268
      %p270 = scmp.ne.s32.totalorder %s259, %s262
      %p271 = scmp.eq.s32.totalorder %s34, 3
      %p272 = por %p270, %p271
      %p273 = scmp.ne.s32.totalorder %s262, %s263
      %p274 = scmp.eq.s32.totalorder %s34, 0
      %p275 = por %p273, %p274
      %p276 = scmp.ne.s32.totalorder %s262, %s263
      %p277 = scmp.eq.s32.totalorder %s35, 3
      %p278 = por %p276, %p277
      %p280 = scmp.ne.s32.totalorder %s263, %s279
      %p281 = scmp.eq.s32.totalorder %s35, 0
      %p282 = por %p280, %p281
      %s283 = ssub.s32 %s37, %s44
      %p284 = scmp.eq.s32.totalorder %s283, 0
      %s286 = sadd.s32 %s285, 1
      %s287 = scalar_select %p284, %s285, %s286
      %p290 = pneg %p284
      %p291 = scmp.eq.s32.totalorder %s29, 3
      %p292 = por %p290, %p291
      %p293 = scmp.ne.s32.totalorder %s285, %s288
      %p294 = scmp.eq.s32.totalorder %s29, 0
      %p295 = por %p293, %p294
      %p296 = scmp.ne.s32.totalorder %s285, %s288
      %p297 = scmp.eq.s32.totalorder %s34, 3
      %p298 = por %p296, %p297
      %p299 = scmp.ne.s32.totalorder %s288, %s289
      %p300 = scmp.eq.s32.totalorder %s34, 0
      %p301 = por %p299, %p300
      %p302 = scmp.ne.s32.totalorder %s288, %s289
      %p303 = scmp.eq.s32.totalorder %s35, 3
      %p304 = por %p302, %p303
      %p306 = scmp.ne.s32.totalorder %s289, %s305
      %p307 = scmp.eq.s32.totalorder %s35, 0
      %p308 = por %p306, %p307
      %s309 = ssub.s32 %s37, %s44
      %p310 = scmp.eq.s32.totalorder %s309, 0
      %s312 = sadd.s32 %s311, 1
      %s313 = scalar_select %p310, %s311, %s312
      %p316 = pneg %p310
      %p317 = scmp.eq.s32.totalorder %s29, 3
      %p318 = por %p316, %p317
      %p319 = scmp.ne.s32.totalorder %s311, %s314
      %p320 = scmp.eq.s32.totalorder %s29, 0
      %p321 = por %p319, %p320
      %p322 = scmp.ne.s32.totalorder %s311, %s314
      %p323 = scmp.eq.s32.totalorder %s34, 3
      %p324 = por %p322, %p323
      %p325 = scmp.ne.s32.totalorder %s314, %s315
      %p326 = scmp.eq.s32.totalorder %s34, 0
      %p327 = por %p325, %p326
      %p328 = scmp.ne.s32.totalorder %s314, %s315
      %p329 = scmp.eq.s32.totalorder %s35, 3
      %p330 = por %p328, %p329
      %p332 = scmp.ne.s32.totalorder %s315, %s331
      %p333 = scmp.eq.s32.totalorder %s35, 0
      %p334 = por %p332, %p333
      %s335 = ssub.s32 %s37, %s44
      %p336 = scmp.eq.s32.totalorder %s335, 0
      %s338 = sadd.s32 %s337, 1
      %s339 = scalar_select %p336, %s337, %s338
      %p342 = pneg %p336
      %p343 = scmp.eq.s32.totalorder %s29, 3
      %p344 = por %p342, %p343
      %p345 = scmp.ne.s32.totalorder %s337, %s340
      %p346 = scmp.eq.s32.totalorder %s29, 0
      %p347 = por %p345, %p346
      %p348 = scmp.ne.s32.totalorder %s337, %s340
      %p349 = scmp.eq.s32.totalorder %s34, 3
      %p350 = por %p348, %p349
      %p351 = scmp.ne.s32.totalorder %s340, %s341
      %p352 = scmp.eq.s32.totalorder %s34, 0
      %p353 = por %p351, %p352
      %p354 = scmp.ne.s32.totalorder %s340, %s341
      %p355 = scmp.eq.s32.totalorder %s35, 3
      %p356 = por %p354, %p355
      %p358 = scmp.ne.s32.totalorder %s341, %s357
      %p359 = scmp.eq.s32.totalorder %s35, 0
      %p360 = por %p358, %p359
      %s362 = sadd.s32 %s361, 1
      %p365 = scmp.eq.s32.totalorder %s29, 3
      %p366 = scmp.ne.s32.totalorder %s361, %s363
      %p367 = scmp.eq.s32.totalorder %s29, 0
      %p368 = por %p366, %p367
      %p369 = scmp.ne.s32.totalorder %s361, %s363
      %p370 = scmp.eq.s32.totalorder %s34, 3
      %p371 = por %p369, %p370
      %p372 = scmp.ne.s32.totalorder %s363, %s364
      %p373 = scmp.eq.s32.totalorder %s34, 0
      %p374 = por %p372, %p373
      %p375 = scmp.ne.s32.totalorder %s363, %s364
      %p376 = scmp.eq.s32.totalorder %s35, 3
      %p377 = por %p375, %p376
      %p379 = scmp.ne.s32.totalorder %s364, %s378
      %p380 = scmp.eq.s32.totalorder %s35, 0
      %p381 = por %p379, %p380
      %s383 = sadd.s32 %s382, 1
      %p386 = scmp.eq.s32.totalorder %s29, 3
      %p387 = scmp.ne.s32.totalorder %s382, %s384
      %p388 = scmp.eq.s32.totalorder %s29, 0
      %p389 = por %p387, %p388
      %p390 = scmp.ne.s32.totalorder %s382, %s384
      %p391 = scmp.eq.s32.totalorder %s34, 3
      %p392 = por %p390, %p391
      %p393 = scmp.ne.s32.totalorder %s384, %s385
      %p394 = scmp.eq.s32.totalorder %s34, 0
      %p395 = por %p393, %p394
      %p396 = scmp.ne.s32.totalorder %s384, %s385
      %p397 = scmp.eq.s32.totalorder %s35, 3
      %p398 = por %p396, %p397
      %p400 = scmp.ne.s32.totalorder %s385, %s399
      %p401 = scmp.eq.s32.totalorder %s35, 0
      %p402 = por %p400, %p401
      %s403 = ssub.s32 %s36, %s48
      %p404 = scmp.eq.s32.totalorder %s403, 0
      %s406 = sadd.s32 %s405, 1
      %s407 = scalar_select %p404, %s405, %s406
      %p410 = pneg %p404
      %p411 = scmp.eq.s32.totalorder %s29, 3
      %p412 = por %p410, %p411
      %p413 = scmp.ne.s32.totalorder %s405, %s408
      %p414 = scmp.eq.s32.totalorder %s29, 0
      %p415 = por %p413, %p414
      %p416 = scmp.ne.s32.totalorder %s405, %s408
      %p417 = scmp.eq.s32.totalorder %s34, 3
      %p418 = por %p416, %p417
      %p419 = scmp.ne.s32.totalorder %s408, %s409
      %p420 = scmp.eq.s32.totalorder %s34, 0
      %p421 = por %p419, %p420
      %p422 = scmp.ne.s32.totalorder %s408, %s409
      %p423 = scmp.eq.s32.totalorder %s35, 3
      %p424 = por %p422, %p423
      %p426 = scmp.ne.s32.totalorder %s409, %s425
      %p427 = scmp.eq.s32.totalorder %s35, 0
      %p428 = por %p426, %p427
      %p429 = scmp.le.s32.totalorder 1, %s29
      %p430 = scmp.lt.s32.totalorder %s29, 5
      %p431 = pnand %p429, %p430
      %p432 = pneg %p431
      // Predicated region
      $region9: #{bert_embedder_forward.1} parent=5 // pred_check
        _
      $region10: #{bert_embedder_forward.1} parent=5 // pred_check_branch
        %434 = sbr.rel (%p431) target = $region12
      $region11: #{bert_embedder_forward.1} parent=5 // pred_region
        %s435 = ssub.s32 %s29, 1
        // Predicated region
        $region13: #{bert_embedder_forward.1} parent=11 // pred_check
          %p436 = pneg %p374
        $region14: #{bert_embedder_forward.1} parent=11 // pred_check_branch
          %438 = sbr.rel (%p436) target = $region16
        $region15: #{bert_embedder_forward.1} parent=11 // pred_region
          _
        $region16: #{bert_embedder_forward.1} parent=11 // pred_fallthru
          _
        // Predicated region
        $region17: #{bert_embedder_forward.1} parent=11 // pred_check
          %p439 = pneg %p395
        $region18: #{bert_embedder_forward.1} parent=11 // pred_check_branch
          %441 = sbr.rel (%p439) target = $region20
        $region19: #{bert_embedder_forward.1} parent=11 // pred_region
          _
        $region20: #{bert_embedder_forward.1} parent=11 // pred_fallthru
          _
      $region12: #{bert_embedder_forward.1} parent=5 // pred_fallthru
        _
      %p442 = scmp.lt.s32.totalorder %s29, 4
      // Predicated region
      $region21: #{bert_embedder_forward.1} parent=5 // pred_check
        %p443 = pneg %p442
      $region22: #{bert_embedder_forward.1} parent=5 // pred_check_branch
        %445 = sbr.rel (%p443) target = $region24
      $region23: #{bert_embedder_forward.1} parent=5 // pred_region
        // Predicated region
        $region25: #{bert_embedder_forward.1} parent=23 // pred_check
          %p446 = pneg %p61
        $region26: #{bert_embedder_forward.1} parent=23 // pred_check_branch
          %448 = sbr.rel (%p446) target = $region28
        $region27: #{bert_embedder_forward.1} parent=23 // pred_region
          %p449 = scmp.lt.s32.totalorder %s36, 1
          %s450 = scalar_select %p449, %s36, 1
          %s451 = smul.addr %s450, 8
          %s452 = scalar_lea.vmem %s0, %s451
        $region28: #{bert_embedder_forward.1} parent=23 // pred_fallthru
          _
        // Predicated region
        $region29: #{bert_embedder_forward.1} parent=23 // pred_check
          %p453 = pneg %p87
        $region30: #{bert_embedder_forward.1} parent=23 // pred_check_branch
          %455 = sbr.rel (%p453) target = $region32
        $region31: #{bert_embedder_forward.1} parent=23 // pred_region
          %p456 = scmp.lt.s32.totalorder %s37, 1
          %s457 = scalar_select %p456, %s37, 1
          %s458 = scalar_lea.vmem %s1, %s457
        $region32: #{bert_embedder_forward.1} parent=23 // pred_fallthru
          _
        // Predicated region
        $region33: #{bert_embedder_forward.1} parent=23 // pred_check
          %p459 = pneg %p113
        $region34: #{bert_embedder_forward.1} parent=23 // pred_check_branch
          %461 = sbr.rel (%p459) target = $region36
        $region35: #{bert_embedder_forward.1} parent=23 // pred_region
          %p462 = scmp.lt.s32.totalorder %s37, 1
          %s463 = scalar_select %p462, %s37, 1
          %s464 = scalar_lea.vmem %s2, %s463
        $region36: #{bert_embedder_forward.1} parent=23 // pred_fallthru
          _
        // Predicated region
        $region37: #{bert_embedder_forward.1} parent=23 // pred_check
          %p465 = pneg %p139
        $region38: #{bert_embedder_forward.1} parent=23 // pred_check_branch
          %467 = sbr.rel (%p465) target = $region40
        $region39: #{bert_embedder_forward.1} parent=23 // pred_region
          %s468 = sand.u32 %s129, 1
          %s469 = scalar_lea.sflag [#allocation4], %s468
          %s470 = sand.u32 %s129, 1
          %s471 = smul.addr %s470, 192
          %s472 = scalar_lea.vmem [#allocation3], %s471
          %s474 = ssub.s32 3072, 3072
          %475 = vsyncadd %s469, %s474
          %s476 = smul.addr %s37, 48
          %s477 = smul.addr %s476, 64
          %s478 = scalar_lea.hbm %s3, %s477
          %s479 = sshll.u32 %s472, 4
          %s480 = int_to_ptr.vmem [resolvable:$true] %s479
          %485 = dma.hbm_to_vmem [thread:$0]  %s478, 3072, %s480, %s469, 192, 192, 12
        $region40: #{bert_embedder_forward.1} parent=23 // pred_fallthru
          _
        // Predicated region
        $region41: #{bert_embedder_forward.1} parent=23 // pred_check
          %p486 = pneg %p165
        $region42: #{bert_embedder_forward.1} parent=23 // pred_check_branch
          %488 = sbr.rel (%p486) target = $region44
        $region43: #{bert_embedder_forward.1} parent=23 // pred_region
          %p489 = scmp.lt.s32.totalorder %s37, 1
          %s490 = scalar_select %p489, %s37, 1
          %s491 = smul.addr %s490, 16
          %s492 = smul.addr %s491, 4
          %s493 = scalar_lea.vmem %s4, %s492
        $region44: #{bert_embedder_forward.1} parent=23 // pred_fallthru
          _
        // Predicated region
        $region45: #{bert_embedder_forward.1} parent=23 // pred_check
          %p494 = pneg %p191
        $region46: #{bert_embedder_forward.1} parent=23 // pred_check_branch
          %496 = sbr.rel (%p494) target = $region48
        $region47: #{bert_embedder_forward.1} parent=23 // pred_region
          %p497 = scmp.lt.s32.totalorder %s37, 1
          %s498 = scalar_select %p497, %s37, 1
          %s499 = scalar_lea.vmem %s5, %s498
        $region48: #{bert_embedder_forward.1} parent=23 // pred_fallthru
          _
        // Predicated region
        $region49: #{bert_embedder_forward.1} parent=23 // pred_check
          %p500 = pneg %p217
        $region50: #{bert_embedder_forward.1} parent=23 // pred_check_branch
          %502 = sbr.rel (%p500) target = $region52
        $region51: #{bert_embedder_forward.1} parent=23 // pred_region
          %p503 = scmp.lt.s32.totalorder %s37, 1
          %s504 = scalar_select %p503, %s37, 1
          %s505 = scalar_lea.vmem %s6, %s504
        $region52: #{bert_embedder_forward.1} parent=23 // pred_fallthru
          _
        // Predicated region
        $region53: #{bert_embedder_forward.1} parent=23 // pred_check
          %p506 = pneg %p243
        $region54: #{bert_embedder_forward.1} parent=23 // pred_check_branch
          %508 = sbr.rel (%p506) target = $region56
        $region55: #{bert_embedder_forward.1} parent=23 // pred_region
          %p509 = scmp.lt.s32.totalorder %s37, 1
          %s510 = scalar_select %p509, %s37, 1
          %s511 = scalar_lea.vmem %s7, %s510
        $region56: #{bert_embedder_forward.1} parent=23 // pred_fallthru
          _
        // Predicated region
        $region57: #{bert_embedder_forward.1} parent=23 // pred_check
          %p512 = pneg %p269
        $region58: #{bert_embedder_forward.1} parent=23 // pred_check_branch
          %514 = sbr.rel (%p512) target = $region60
        $region59: #{bert_embedder_forward.1} parent=23 // pred_region
          %s515 = sand.u32 %s29, 1
          %s516 = scalar_lea.sflag [#allocation7], %s515
          %s517 = sand.u32 %s259, 1
          %s518 = smul.addr %s517, 256
          %s519 = scalar_lea.vmem [#allocation6], %s518
          %s521 = ssub.s32 4096, 4096
          %522 = vsyncadd %s516, %s521
          %s523 = smul.addr %s37, 64
          %s524 = smul.addr %s523, 64
          %s525 = scalar_lea.hbm %s8, %s524
          %s526 = sshll.u32 %s519, 4
          %s527 = int_to_ptr.vmem [resolvable:$true] %s526
          %532 = dma.hbm_to_vmem [thread:$0]  %s525, 4096, %s527, %s516, 256, 256, 16
        $region60: #{bert_embedder_forward.1} parent=23 // pred_fallthru
          _
        // Predicated region
        $region61: #{bert_embedder_forward.1} parent=23 // pred_check
          %p533 = pneg %p295
        $region62: #{bert_embedder_forward.1} parent=23 // pred_check_branch
          %535 = sbr.rel (%p533) target = $region64
        $region63: #{bert_embedder_forward.1} parent=23 // pred_region
          %p536 = scmp.lt.s32.totalorder %s37, 1
          %s537 = scalar_select %p536, %s37, 1
          %s538 = smul.addr %s537, 4
          %s539 = scalar_lea.vmem %s9, %s538
        $region64: #{bert_embedder_forward.1} parent=23 // pred_fallthru
          _
        // Predicated region
        $region65: #{bert_embedder_forward.1} parent=23 // pred_check
          %p540 = pneg %p321
        $region66: #{bert_embedder_forward.1} parent=23 // pred_check_branch
          %542 = sbr.rel (%p540) target = $region68
        $region67: #{bert_embedder_forward.1} parent=23 // pred_region
          %s543 = sand.u32 %s29, 1
          %s544 = scalar_lea.sflag [#allocation7], %s543
          %s545 = sand.u32 %s311, 1
          %s546 = smul.addr %s545, 256
          %s547 = scalar_lea.vmem [#allocation8], %s546
          %s549 = ssub.s32 4096, 4096
          %550 = vsyncadd %s544, %s549
          %s551 = smul.addr %s37, 64
          %s552 = smul.addr %s551, 64
          %s553 = scalar_lea.hbm %s10, %s552
          %s554 = sshll.u32 %s547, 4
          %s555 = int_to_ptr.vmem [resolvable:$true] %s554
          %560 = dma.hbm_to_vmem [thread:$0]  %s553, 4096, %s555, %s544, 64, 64, 4
        $region68: #{bert_embedder_forward.1} parent=23 // pred_fallthru
          _
        // Predicated region
        $region69: #{bert_embedder_forward.1} parent=23 // pred_check
          %p561 = pneg %p347
        $region70: #{bert_embedder_forward.1} parent=23 // pred_check_branch
          %563 = sbr.rel (%p561) target = $region72
        $region71: #{bert_embedder_forward.1} parent=23 // pred_region
          %p564 = scmp.lt.s32.totalorder %s37, 1
          %s565 = scalar_select %p564, %s37, 1
          %s566 = scalar_lea.vmem %s11, %s565
        $region72: #{bert_embedder_forward.1} parent=23 // pred_fallthru
          _
      $region24: #{bert_embedder_forward.1} parent=5 // pred_fallthru
        _
      %p567 = scmp.le.s32.totalorder 1, %s29
      %p568 = scmp.lt.s32.totalorder %s29, 5
      %p569 = pnand %p567, %p568
      %p570 = pneg %p569
      // Predicated region
      $region73: #{bert_embedder_forward.1} parent=5 // pred_check
        _
      $region74: #{bert_embedder_forward.1} parent=5 // pred_check_branch
        %572 = sbr.rel (%p569) target = $region76
      $region75: #{bert_embedder_forward.1} parent=5 // pred_region
        %s573 = ssub.s32 %s29, 1
        %s574 = sand.u32 %s132, 1
        %s575 = scalar_lea.sflag [#allocation4], %s574
        %s576 = sand.u32 %s132, 1
        %s577 = smul.addr %s576, 192
        %s578 = scalar_lea.vmem [#allocation3], %s577
        // Predicated region
        $region77: #{bert_embedder_forward.1} parent=75 // pred_check
          %p579 = pneg %p145
        $region78: #{bert_embedder_forward.1} parent=75 // pred_check_branch
          %581 = sbr.rel (%p579) target = $region80
        $region79: #{bert_embedder_forward.1} parent=75 // pred_region
          %582 = dma.done %s575, 3072
        $region80: #{bert_embedder_forward.1} parent=75 // pred_fallthru
          _
        %s583 = sand.u32 %s34, 1
        %s584 = scalar_lea.sflag [#allocation7], %s583
        %s585 = sand.u32 %s262, 1
        %s586 = smul.addr %s585, 256
        %s587 = scalar_lea.vmem [#allocation6], %s586
        // Predicated region
        $region81: #{bert_embedder_forward.1} parent=75 // pred_check
          %p588 = pneg %p275
        $region82: #{bert_embedder_forward.1} parent=75 // pred_check_branch
          %590 = sbr.rel (%p588) target = $region84
        $region83: #{bert_embedder_forward.1} parent=75 // pred_region
          %591 = dma.done %s584, 4096
        $region84: #{bert_embedder_forward.1} parent=75 // pred_fallthru
          _
        %s592 = sand.u32 %s34, 1
        %s593 = scalar_lea.sflag [#allocation7], %s592
        %s594 = sand.u32 %s314, 1
        %s595 = smul.addr %s594, 256
        %s596 = scalar_lea.vmem [#allocation8], %s595
        // Predicated region
        $region85: #{bert_embedder_forward.1} parent=75 // pred_check
          %p597 = pneg %p327
        $region86: #{bert_embedder_forward.1} parent=75 // pred_check_branch
          %599 = sbr.rel (%p597) target = $region88
        $region87: #{bert_embedder_forward.1} parent=75 // pred_region
          %600 = dma.done %s593, 4096
        $region88: #{bert_embedder_forward.1} parent=75 // pred_fallthru
          _
        %p601 = scmp.lt.s32.totalorder %s38, 1
        %s602 = scalar_select %p601, %s38, 1
        %s603 = smul.addr %s602, 8
        %s604 = scalar_lea.vmem %s0, %s603
        %p605 = pneg %p67
        %p606 = pneg %p64
        %p607 = scmp.lt.s32.totalorder %s39, 1
        %s608 = scalar_select %p607, %s39, 1
        %s609 = scalar_lea.vmem %s1, %s608
        %p610 = pneg %p93
        %p611 = pneg %p90
        %p612 = scmp.lt.s32.totalorder %s39, 1
        %s613 = scalar_select %p612, %s39, 1
        %s614 = scalar_lea.vmem %s2, %s613
        %p615 = pneg %p119
        %p616 = pneg %p116
        %s617 = sand.u32 %s132, 1
        %s618 = scalar_lea.sflag [#allocation4], %s617
        %s619 = sand.u32 %s132, 1
        %s620 = smul.addr %s619, 192
        %s621 = scalar_lea.vmem [#allocation3], %s620
        %p622 = pneg %p145
        %p623 = pneg %p142
        %p624 = scmp.lt.s32.totalorder %s39, 1
        %s625 = scalar_select %p624, %s39, 1
        %s626 = smul.addr %s625, 16
        %s627 = smul.addr %s626, 4
        %s628 = scalar_lea.vmem %s4, %s627
        %p629 = pneg %p171
        %p630 = pneg %p168
        %p631 = scmp.lt.s32.totalorder %s39, 1
        %s632 = scalar_select %p631, %s39, 1
        %s633 = scalar_lea.vmem %s5, %s632
        %p634 = pneg %p197
        %p635 = pneg %p194
        %p636 = scmp.lt.s32.totalorder %s39, 1
        %s637 = scalar_select %p636, %s39, 1
        %s638 = scalar_lea.vmem %s6, %s637
        %p639 = pneg %p223
        %p640 = pneg %p220
        %p641 = scmp.lt.s32.totalorder %s39, 1
        %s642 = scalar_select %p641, %s39, 1
        %s643 = scalar_lea.vmem %s7, %s642
        %p644 = pneg %p249
        %p645 = pneg %p246
        %s646 = sand.u32 %s34, 1
        %s647 = scalar_lea.sflag [#allocation7], %s646
        %s648 = sand.u32 %s262, 1
        %s649 = smul.addr %s648, 256
        %s650 = scalar_lea.vmem [#allocation6], %s649
        %p651 = pneg %p275
        %p652 = pneg %p272
        %p653 = scmp.lt.s32.totalorder %s39, 1
        %s654 = scalar_select %p653, %s39, 1
        %s655 = smul.addr %s654, 4
        %s656 = scalar_lea.vmem %s9, %s655
        %p657 = pneg %p301
        %p658 = pneg %p298
        %s659 = sand.u32 %s34, 1
        %s660 = scalar_lea.sflag [#allocation7], %s659
        %s661 = sand.u32 %s314, 1
        %s662 = smul.addr %s661, 256
        %s663 = scalar_lea.vmem [#allocation8], %s662
        %p664 = pneg %p327
        %p665 = pneg %p324
        %p666 = scmp.lt.s32.totalorder %s39, 1
        %s667 = scalar_select %p666, %s39, 1
        %s668 = scalar_lea.vmem %s11, %s667
        %p669 = pneg %p353
        %p670 = pneg %p350
        %p671 = pneg %p374
        %p672 = pneg %p371
        %p673 = pneg %p395
        %p674 = pneg %p392
        %p675 = pneg %p421
        %p676 = pneg %p418
        %s677 = sand.u32 %s408, 1
        %s678 = scalar_lea.sflag [#allocation5], %s677
        %s679 = sand.u32 %s408, 1
        %s680 = smul.addr %s679, 8
        %s681 = scalar_lea.vmem [#allocation9], %s680
        %p682 = scmp.lt.s32.totalorder %s38, 1
        %s683 = scalar_select %p682, %s38, 1
        %s684 = smul.addr %s683, 8
        %s685 = scalar_lea.vmem %s0, %s684
        %p686 = scmp.lt.s32.totalorder %s39, 1
        %s687 = scalar_select %p686, %s39, 1
        %s688 = scalar_lea.vmem %s1, %s687
        %p689 = scmp.lt.s32.totalorder %s39, 1
        %s690 = scalar_select %p689, %s39, 1
        %s691 = scalar_lea.vmem %s2, %s690
        %p692 = scmp.lt.s32.totalorder %s39, 1
        %s693 = scalar_select %p692, %s39, 1
        %s694 = smul.addr %s693, 16
        %s695 = smul.addr %s694, 4
        %s696 = scalar_lea.vmem %s4, %s695
        %p697 = scmp.lt.s32.totalorder %s39, 1
        %s698 = scalar_select %p697, %s39, 1
        %s699 = scalar_lea.vmem %s5, %s698
        %p700 = scmp.lt.s32.totalorder %s39, 1
        %s701 = scalar_select %p700, %s39, 1
        %s702 = scalar_lea.vmem %s6, %s701
        %p703 = scmp.lt.s32.totalorder %s39, 1
        %s704 = scalar_select %p703, %s39, 1
        %s705 = scalar_lea.vmem %s7, %s704
        %p706 = scmp.lt.s32.totalorder %s39, 1
        %s707 = scalar_select %p706, %s39, 1
        %s708 = smul.addr %s707, 4
        %s709 = scalar_lea.vmem %s9, %s708
        %p710 = scmp.lt.s32.totalorder %s39, 1
        %s711 = scalar_select %p710, %s39, 1
        %s712 = scalar_lea.vmem %s11, %s711
        %p714 = scmp.eq.s32.totalorder %s39, 0
        // Predicated region
        $region89: #{bert_embedder_forward.1} parent=75 // pred_check
          %p715 = pneg %p714
        $region90: #{bert_embedder_forward.1} parent=75 // pred_check_branch
          %717 = sbr.rel (%p715) target = $region92
        $region91: #{bert_embedder_forward.1} parent=75 // pred_region
          %v718 = vld [vmem:[%s685] sm:$0xff]
          %719 = vst [vmem:[#allocation2] sm:$0xff] %v718
        $region92: #{bert_embedder_forward.1} parent=75 // pred_fallthru
          _
        %v720 = vld [vmem:[#allocation2] sm:$0xff]
        %v721 = vld [vmem:[%s688] sm:$0x1]
        %v722 = vld [vmem:[%s691] sm:$0x1]
        %v723 = vld [vmem:[%s702] sm:$0x1]
        %v724 = vld [vmem:[%s705] sm:$0x1]
        %v725 = vld [vmem:[%s699] sm:$0x1]
        %v726 = vld [vmem:[%s709] sm:$0xf]
        %v727 = vld [vmem:[%s712] sm:$0x1]
        %v728 = vld [vmem:[%s578] sm:$0xff]
        %v729 = vld [vmem:[%s578 + $0x8] sm:$0xf]
        %v730 = vld [vmem:[%s578 + $0xc] sm:$0xff]
        %v731 = vld [vmem:[%s578 + $0x14] sm:$0xf]
        %v732 = vld [vmem:[%s578 + $0x18] sm:$0xff]
        %v733 = vld [vmem:[%s578 + $0x20] sm:$0xf]
        %v734 = vld [vmem:[%s578 + $0x24] sm:$0xff]
        %v735 = vld [vmem:[%s578 + $0x2c] sm:$0xf]
        %v736 = vld [vmem:[%s578 + $0x30] sm:$0xff]
        %v737 = vld [vmem:[%s578 + $0x38] sm:$0xf]
        %v738 = vld [vmem:[%s578 + $0x3c] sm:$0xff]
        %v739 = vld [vmem:[%s578 + $0x44] sm:$0xf]
        %v740 = vld [vmem:[%s578 + $0x48] sm:$0xff]
        %v741 = vld [vmem:[%s578 + $0x50] sm:$0xf]
        %v742 = vld [vmem:[%s578 + $0x54] sm:$0xff]
        %v743 = vld [vmem:[%s578 + $0x5c] sm:$0xf]
        %v744 = vld [vmem:[%s578 + $0x60] sm:$0xff]
        %v745 = vld [vmem:[%s578 + $0x68] sm:$0xf]
        %v746 = vld [vmem:[%s578 + $0x6c] sm:$0xff]
        %v747 = vld [vmem:[%s578 + $0x74] sm:$0xf]
        %v748 = vld [vmem:[%s578 + $0x78] sm:$0xff]
        %v749 = vld [vmem:[%s578 + $0x80] sm:$0xf]
        %v750 = vld [vmem:[%s578 + $0x84] sm:$0xff]
        %v751 = vld [vmem:[%s578 + $0x8c] sm:$0xf]
        %v752 = vld [vmem:[%s578 + $0x90] sm:$0xff]
        %v753 = vld [vmem:[%s578 + $0x98] sm:$0xf]
        %v754 = vld [vmem:[%s578 + $0x9c] sm:$0xff]
        %v755 = vld [vmem:[%s578 + $0xa4] sm:$0xf]
        %v756 = vld [vmem:[%s578 + $0xa8] sm:$0xff]
        %v757 = vld [vmem:[%s578 + $0xb0] sm:$0xf]
        %v758 = vld [vmem:[%s578 + $0xb4] sm:$0xff]
        %v759 = vld [vmem:[%s578 + $0xbc] sm:$0xf]
        %v760 = vld [vmem:[%s696] sm:$0xf]
        %v761 = vld [vmem:[%s696 + $0x4] sm:$0xf]
        %v762 = vld [vmem:[%s696 + $0x8] sm:$0xf]
        %v763 = vld [vmem:[%s696 + $0xc] sm:$0xf]
        %v764 = vld [vmem:[%s696 + $0x10] sm:$0xf]
        %v765 = vld [vmem:[%s696 + $0x14] sm:$0xf]
        %v766 = vld [vmem:[%s696 + $0x18] sm:$0xf]
        %v767 = vld [vmem:[%s696 + $0x1c] sm:$0xf]
        %v768 = vld [vmem:[%s696 + $0x20] sm:$0xf]
        %v769 = vld [vmem:[%s696 + $0x24] sm:$0xf]
        %v770 = vld [vmem:[%s696 + $0x28] sm:$0xf]
        %v771 = vld [vmem:[%s696 + $0x2c] sm:$0xf]
        %v772 = vld [vmem:[%s696 + $0x30] sm:$0xf]
        %v773 = vld [vmem:[%s696 + $0x34] sm:$0xf]
        %v774 = vld [vmem:[%s696 + $0x38] sm:$0xf]
        %v775 = vld [vmem:[%s696 + $0x3c] sm:$0xf]
        %v776 = vld [vmem:[%s587] sm:$0xff]
        %v777 = vld [vmem:[%s587 + $0x8] sm:$0xff]
        %v778 = vld [vmem:[%s587 + $0x10] sm:$0xff]
        %v779 = vld [vmem:[%s587 + $0x18] sm:$0xff]
        %v780 = vld [vmem:[%s587 + $0x20] sm:$0xff]
        %v781 = vld [vmem:[%s587 + $0x28] sm:$0xff]
        %v782 = vld [vmem:[%s587 + $0x30] sm:$0xff]
        %v783 = vld [vmem:[%s587 + $0x38] sm:$0xff]
        %v784 = vld [vmem:[%s587 + $0x40] sm:$0xff]
        %v785 = vld [vmem:[%s587 + $0x48] sm:$0xff]
        %v786 = vld [vmem:[%s587 + $0x50] sm:$0xff]
        %v787 = vld [vmem:[%s587 + $0x58] sm:$0xff]
        %v788 = vld [vmem:[%s587 + $0x60] sm:$0xff]
        %v789 = vld [vmem:[%s587 + $0x68] sm:$0xff]
        %v790 = vld [vmem:[%s587 + $0x70] sm:$0xff]
        %v791 = vld [vmem:[%s587 + $0x78] sm:$0xff]
        %v792 = vld [vmem:[%s587 + $0x80] sm:$0xff]
        %v793 = vld [vmem:[%s587 + $0x88] sm:$0xff]
        %v794 = vld [vmem:[%s587 + $0x90] sm:$0xff]
        %v795 = vld [vmem:[%s587 + $0x98] sm:$0xff]
        %v796 = vld [vmem:[%s587 + $0xa0] sm:$0xff]
        %v797 = vld [vmem:[%s587 + $0xa8] sm:$0xff]
        %v798 = vld [vmem:[%s587 + $0xb0] sm:$0xff]
        %v799 = vld [vmem:[%s587 + $0xb8] sm:$0xff]
        %v800 = vld [vmem:[%s587 + $0xc0] sm:$0xff]
        %v801 = vld [vmem:[%s587 + $0xc8] sm:$0xff]
        %v802 = vld [vmem:[%s587 + $0xd0] sm:$0xff]
        %v803 = vld [vmem:[%s587 + $0xd8] sm:$0xff]
        %v804 = vld [vmem:[%s587 + $0xe0] sm:$0xff]
        %v805 = vld [vmem:[%s587 + $0xe8] sm:$0xff]
        %v806 = vld [vmem:[%s587 + $0xf0] sm:$0xff]
        %v807 = vld [vmem:[%s587 + $0xf8] sm:$0xff]
        %v808 = vld [vmem:[%s596] sm:$0xf]
        %v809 = vld [vmem:[%s596 + $0x4] sm:$0xf]
        %v810 = vld [vmem:[%s596 + $0x8] sm:$0xf]
        %v811 = vld [vmem:[%s596 + $0xc] sm:$0xf]
        %v812 = vld [vmem:[%s596 + $0x10] sm:$0xf]
        %v813 = vld [vmem:[%s596 + $0x14] sm:$0xf]
        %v814 = vld [vmem:[%s596 + $0x18] sm:$0xf]
        %v815 = vld [vmem:[%s596 + $0x1c] sm:$0xf]
        %v816 = vld [vmem:[%s596 + $0x20] sm:$0xf]
        %v817 = vld [vmem:[%s596 + $0x24] sm:$0xf]
        %v818 = vld [vmem:[%s596 + $0x28] sm:$0xf]
        %v819 = vld [vmem:[%s596 + $0x2c] sm:$0xf]
        %v820 = vld [vmem:[%s596 + $0x30] sm:$0xf]
        %v821 = vld [vmem:[%s596 + $0x34] sm:$0xf]
        %v822 = vld [vmem:[%s596 + $0x38] sm:$0xf]
        %v823 = vld [vmem:[%s596 + $0x3c] sm:$0xf]
        %v824 = vld [vmem:[%s596 + $0x40] sm:$0xf]
        %v825 = vld [vmem:[%s596 + $0x44] sm:$0xf]
        %v826 = vld [vmem:[%s596 + $0x48] sm:$0xf]
        %v827 = vld [vmem:[%s596 + $0x4c] sm:$0xf]
        %v828 = vld [vmem:[%s596 + $0x50] sm:$0xf]
        %v829 = vld [vmem:[%s596 + $0x54] sm:$0xf]
        %v830 = vld [vmem:[%s596 + $0x58] sm:$0xf]
        %v831 = vld [vmem:[%s596 + $0x5c] sm:$0xf]
        %v832 = vld [vmem:[%s596 + $0x60] sm:$0xf]
        %v833 = vld [vmem:[%s596 + $0x64] sm:$0xf]
        %v834 = vld [vmem:[%s596 + $0x68] sm:$0xf]
        %v835 = vld [vmem:[%s596 + $0x6c] sm:$0xf]
        %v836 = vld [vmem:[%s596 + $0x70] sm:$0xf]
        %v837 = vld [vmem:[%s596 + $0x74] sm:$0xf]
        %v838 = vld [vmem:[%s596 + $0x78] sm:$0xf]
        %v839 = vld [vmem:[%s596 + $0x7c] sm:$0xf]
        %v840 = vld [vmem:[%s596 + $0x80] sm:$0xf]
        %v841 = vld [vmem:[%s596 + $0x84] sm:$0xf]
        %v842 = vld [vmem:[%s596 + $0x88] sm:$0xf]
        %v843 = vld [vmem:[%s596 + $0x8c] sm:$0xf]
        %v844 = vld [vmem:[%s596 + $0x90] sm:$0xf]
        %v845 = vld [vmem:[%s596 + $0x94] sm:$0xf]
        %v846 = vld [vmem:[%s596 + $0x98] sm:$0xf]
        %v847 = vld [vmem:[%s596 + $0x9c] sm:$0xf]
        %v848 = vld [vmem:[%s596 + $0xa0] sm:$0xf]
        %v849 = vld [vmem:[%s596 + $0xa4] sm:$0xf]
        %v850 = vld [vmem:[%s596 + $0xa8] sm:$0xf]
        %v851 = vld [vmem:[%s596 + $0xac] sm:$0xf]
        %v852 = vld [vmem:[%s596 + $0xb0] sm:$0xf]
        %v853 = vld [vmem:[%s596 + $0xb4] sm:$0xf]
        %v854 = vld [vmem:[%s596 + $0xb8] sm:$0xf]
        %v855 = vld [vmem:[%s596 + $0xbc] sm:$0xf]
        %v856 = vld [vmem:[%s596 + $0xc0] sm:$0xf]
        %v857 = vld [vmem:[%s596 + $0xc4] sm:$0xf]
        %v858 = vld [vmem:[%s596 + $0xc8] sm:$0xf]
        %v859 = vld [vmem:[%s596 + $0xcc] sm:$0xf]
        %v860 = vld [vmem:[%s596 + $0xd0] sm:$0xf]
        %v861 = vld [vmem:[%s596 + $0xd4] sm:$0xf]
        %v862 = vld [vmem:[%s596 + $0xd8] sm:$0xf]
        %v863 = vld [vmem:[%s596 + $0xdc] sm:$0xf]
        %v864 = vld [vmem:[%s596 + $0xe0] sm:$0xf]
        %v865 = vld [vmem:[%s596 + $0xe4] sm:$0xf]
        %v866 = vld [vmem:[%s596 + $0xe8] sm:$0xf]
        %v867 = vld [vmem:[%s596 + $0xec] sm:$0xf]
        %v868 = vld [vmem:[%s596 + $0xf0] sm:$0xf]
        %v869 = vld [vmem:[%s596 + $0xf4] sm:$0xf]
        %v870 = vld [vmem:[%s596 + $0xf8] sm:$0xf]
        %v871 = vld [vmem:[%s596 + $0xfc] sm:$0xf]
        %872 = vadd.xlane.f32.xlu0 %v720
        %v873 = vpop.xlane.xlu0 %872
        %v874 = vrcp.pop 128.0
        %v875 = vmul.f32 %v873, %v874
        %v876 = vsub.f32 %v720, %v875
        %v877 = vmul.f32 %v876, %v876
        %878 = vadd.xlane.f32.xlu0 %v877
        %v879 = vpop.xlane.xlu0 %878
        %v880 = vmul.f32 %v879, %v874
        %v881 = vadd.f32 %v880, 1e-05
        %v882 = vrsqrt.pop %v881
        %v883 = vmul.f32 %v876, %v882
        %v885 = vlaneseq
        %v886 = vshrl.u32 %v885, 7
        %v887 = vsub.s32 0, %v886
        %v888 = vrot.slane %v721, %v887
        %v890 = vmul.f32 %v883, %v888
        %v892 = vlaneseq
        %v893 = vshrl.u32 %v892, 7
        %v894 = vsub.s32 0, %v893
        %v895 = vrot.slane %v722, %v894
        %v897 = vadd.f32 %v890, %v895
        %v898 = vpack.c.bf16 %v897, %v897
        %v931 = vunpack.c.l.b16 %v728
        %v932 = vunpack.c.h.b16 %v728
        %v933 = vunpack.c.l.b16 %v729
        %v934 = vunpack.c.l.b16 %v730
        %v935 = vunpack.c.h.b16 %v730
        %v936 = vunpack.c.l.b16 %v731
        %v937 = vunpack.c.l.b16 %v732
        %v938 = vunpack.c.h.b16 %v732
        %v939 = vunpack.c.l.b16 %v733
        %v940 = vunpack.c.l.b16 %v734
        %v941 = vunpack.c.h.b16 %v734
        %v942 = vunpack.c.l.b16 %v735
        %v943 = vunpack.c.l.b16 %v736
        %v944 = vunpack.c.h.b16 %v736
        %v945 = vunpack.c.l.b16 %v737
        %v946 = vunpack.c.l.b16 %v738
        %v947 = vunpack.c.h.b16 %v738
        %v948 = vunpack.c.l.b16 %v739
        %v949 = vunpack.c.l.b16 %v740
        %v950 = vunpack.c.h.b16 %v740
        %v951 = vunpack.c.l.b16 %v741
        %v952 = vunpack.c.l.b16 %v742
        %v953 = vunpack.c.h.b16 %v742
        %v954 = vunpack.c.l.b16 %v743
        %v955 = vunpack.c.l.b16 %v744
        %v956 = vunpack.c.h.b16 %v744
        %v957 = vunpack.c.l.b16 %v745
        %v958 = vunpack.c.l.b16 %v746
        %v959 = vunpack.c.h.b16 %v746
        %v960 = vunpack.c.l.b16 %v747
        %v961 = vunpack.c.l.b16 %v748
        %v962 = vunpack.c.h.b16 %v748
        %v963 = vunpack.c.l.b16 %v749
        %v964 = vunpack.c.l.b16 %v750
        %v965 = vunpack.c.h.b16 %v750
        %v966 = vunpack.c.l.b16 %v751
        %v967 = vunpack.c.l.b16 %v752
        %v968 = vunpack.c.h.b16 %v752
        %v969 = vunpack.c.l.b16 %v753
        %v970 = vunpack.c.l.b16 %v754
        %v971 = vunpack.c.h.b16 %v754
        %v972 = vunpack.c.l.b16 %v755
        %v973 = vunpack.c.l.b16 %v756
        %v974 = vunpack.c.h.b16 %v756
        %v975 = vunpack.c.l.b16 %v757
        %v976 = vunpack.c.l.b16 %v758
        %v977 = vunpack.c.h.b16 %v758
        %v978 = vunpack.c.l.b16 %v759
        %v979 = vpack.c.b16 %v934, %v931
        %v980 = vpack.c.b16 %v935, %v932
        %v981 = vpack.c.b16 %v936, %v933
        %v982 = vpack.c.b16 %v940, %v937
        %v983 = vpack.c.b16 %v941, %v938
        %v984 = vpack.c.b16 %v942, %v939
        %v985 = vpack.c.b16 %v946, %v943
        %v986 = vpack.c.b16 %v947, %v944
        %v987 = vpack.c.b16 %v948, %v945
        %v988 = vpack.c.b16 %v952, %v949
        %v989 = vpack.c.b16 %v953, %v950
        %v990 = vpack.c.b16 %v954, %v951
        %v991 = vpack.c.b16 %v958, %v955
        %v992 = vpack.c.b16 %v959, %v956
        %v993 = vpack.c.b16 %v960, %v957
        %v994 = vpack.c.b16 %v964, %v961
        %v995 = vpack.c.b16 %v965, %v962
        %v996 = vpack.c.b16 %v966, %v963
        %v997 = vpack.c.b16 %v970, %v967
        %v998 = vpack.c.b16 %v971, %v968
        %v999 = vpack.c.b16 %v972, %v969
        %v1000 = vpack.c.b16 %v976, %v973
        %v1001 = vpack.c.b16 %v977, %v974
        %v1002 = vpack.c.b16 %v978, %v975
        %1027 = vmatprep.subr.bf16.mxu0 %v1001
        %1028 = vmatpush1.bf16.msra.mxu0 %v1000
        %1029 = vmatprep.subr.bf16.mxu0 %v998
        %1030 = vmatpush1.bf16.msra.mxu0 %v997
        %1031 = vmatprep.subr.bf16.mxu0 %v995
        %1032 = vmatpush1.bf16.msra.mxu0 %v994
        %1033 = vmatprep.subr.bf16.mxu0 %v992
        %1034 = vmatpush1.bf16.msra.mxu0 %v991
        %1035 = vmatprep.subr.bf16.mxu0 %v989
        %1036 = vmatpush1.bf16.msra.mxu0 %v988
        %1037 = vmatprep.subr.bf16.mxu0 %v986
        %1038 = vmatpush1.bf16.msra.mxu0 %v985
        %1039 = vmatprep.subr.bf16.mxu0 %v983
        %1040 = vmatpush1.bf16.msra.mxu0 %v982
        %1041 = vmatprep.subr.bf16.mxu0 %v980
        %1042 = vmatpush1.bf16.msra.mxu0 %v979
        %1043 = vmatprep.subr.bf16.mxu0 0
        %1044 = vmatpush2.bf16.msra.mxu0 0
        %1045 = vmatprep.subr.bf16.mxu0 0
        %1046 = vmatpush2.bf16.msra.mxu0 0
        %1047 = vmatprep.subr.bf16.mxu0 0
        %1048 = vmatpush2.bf16.msra.mxu0 0
        %1049 = vmatprep.subr.bf16.mxu0 0
        %1050 = vmatpush2.bf16.msra.mxu0 0
        %1051 = vmatprep.subr.bf16.mxu0 0
        %1052 = vmatpush2.bf16.msra.mxu0 0
        %1053 = vmatprep.subr.bf16.mxu0 0
        %1054 = vmatpush2.bf16.msra.mxu0 0
        %1055 = vmatprep.subr.bf16.mxu0 0
        %1056 = vmatpush2.bf16.msra.mxu0 0
        %1057 = vmatprep.subr.bf16.mxu0 0
        %1058 = vmatpush2.bf16.msra.mxu0 0
        %1059 = vmatprep.mubr.bf16.mxu0 0
        %1060 = vmatmul.mubr.bf16.gmra.mxu0 %v898
        %v1061 = vpop.f32.mrf.mxu0
        %v1062 = vadd.f32 0.0, %v1061
        %v1063 = vpop.f32.mrf.mxu0
        %v1064 = vadd.f32 0.0, %v1063
        %v1065 = vpop.f32.mrf.mxu0
        %v1066 = vpop.f32.mrf.mxu0
        %1067 = vdwg.mxu0
        %1068 = vmatprep.subr.bf16.mxu0 0
        %1069 = vmatpush1.bf16.msra.mxu0 %v1002
        %1070 = vmatprep.subr.bf16.mxu0 0
        %1071 = vmatpush1.bf16.msra.mxu0 %v999
        %1072 = vmatprep.subr.bf16.mxu0 0
        %1073 = vmatpush1.bf16.msra.mxu0 %v996
        %1074 = vmatprep.subr.bf16.mxu0 0
        %1075 = vmatpush1.bf16.msra.mxu0 %v993
        %1076 = vmatprep.subr.bf16.mxu0 0
        %1077 = vmatpush1.bf16.msra.mxu0 %v990
        %1078 = vmatprep.subr.bf16.mxu0 0
        %1079 = vmatpush1.bf16.msra.mxu0 %v987
        %1080 = vmatprep.subr.bf16.mxu0 0
        %1081 = vmatpush1.bf16.msra.mxu0 %v984
        %1082 = vmatprep.subr.bf16.mxu0 0
        %1083 = vmatpush1.bf16.msra.mxu0 %v981
        %1084 = vmatprep.subr.bf16.mxu0 0
        %1085 = vmatpush2.bf16.msra.mxu0 0
        %1086 = vmatprep.subr.bf16.mxu0 0
        %1087 = vmatpush2.bf16.msra.mxu0 0
        %1088 = vmatprep.subr.bf16.mxu0 0
        %1089 = vmatpush2.bf16.msra.mxu0 0
        %1090 = vmatprep.subr.bf16.mxu0 0
        %1091 = vmatpush2.bf16.msra.mxu0 0
        %1092 = vmatprep.subr.bf16.mxu0 0
        %1093 = vmatpush2.bf16.msra.mxu0 0
        %1094 = vmatprep.subr.bf16.mxu0 0
        %1095 = vmatpush2.bf16.msra.mxu0 0
        %1096 = vmatprep.subr.bf16.mxu0 0
        %1097 = vmatpush2.bf16.msra.mxu0 0
        %1098 = vmatprep.subr.bf16.mxu0 0
        %1099 = vmatpush2.bf16.msra.mxu0 0
        %1100 = vmatprep.mubr.bf16.mxu0 0
        %1101 = vmatmul.mubr.bf16.gmra.mxu0 %v898
        %v1102 = vpop.f32.mrf.mxu0
        %v1103 = vadd.f32 0.0, %v1102
        %v1104 = vpop.f32.mrf.mxu0
        %v1105 = vpop.f32.mrf.mxu0
        %v1106 = vpop.f32.mrf.mxu0
        %1107 = vdwg.mxu0
        %v1108 = vpack.c.bf16 %v1062, %v1062
        %v1109 = vpack.c.bf16 %v1064, %v1064
        %v1110 = vpack.c.bf16 %v1103, %v1103
        %vm1111 = vcmask 523264
        %v1113 = vsel %vm1111, %v1108, 0
        %v1116 = vsel %vm1111, %v1109, 0
        %1118 = vmatprep.subr.bf16.mxu0 0
        %1119 = vmatpush1.bf16.xpose.msra.mxu0 0
        %1120 = vmatprep.subr.bf16.mxu0 0
        %1121 = vmatpush1.bf16.xpose.msra.mxu0 0
        %1122 = vmatprep.subr.bf16.mxu0 0
        %1123 = vmatpush1.bf16.xpose.msra.mxu0 0
        %1124 = vmatprep.subr.bf16.mxu0 0
        %1125 = vmatpush1.bf16.xpose.msra.mxu0 0
        %1126 = vmatprep.subr.bf16.mxu0 0
        %1127 = vmatpush1.bf16.xpose.msra.mxu0 0
        %1128 = vmatprep.subr.bf16.mxu0 0
        %1129 = vmatpush1.bf16.xpose.msra.mxu0 0
        %1130 = vmatprep.subr.bf16.mxu0 0
        %1131 = vmatpush1.bf16.xpose.msra.mxu0 0
        %1132 = vmatprep.subr.bf16.mxu0 0
        %1133 = vmatpush1.bf16.xpose.msra.mxu0 %v1116
        %1134 = vmatprep.subr.bf16.mxu0 0
        %1135 = vmatpush2.bf16.xpose.msra.mxu0 0
        %1136 = vmatprep.subr.bf16.mxu0 0
        %1137 = vmatpush2.bf16.xpose.msra.mxu0 0
        %1138 = vmatprep.subr.bf16.mxu0 0
        %1139 = vmatpush2.bf16.xpose.msra.mxu0 0
        %1140 = vmatprep.subr.bf16.mxu0 0
        %1141 = vmatpush2.bf16.xpose.msra.mxu0 0
        %1142 = vmatprep.subr.bf16.mxu0 0
        %1143 = vmatpush2.bf16.xpose.msra.mxu0 0
        %1144 = vmatprep.subr.bf16.mxu0 0
        %1145 = vmatpush2.bf16.xpose.msra.mxu0 0
        %1146 = vmatprep.subr.bf16.mxu0 0
        %1147 = vmatpush2.bf16.xpose.msra.mxu0 0
        %1148 = vmatprep.subr.bf16.mxu0 0
        %1149 = vmatpush2.bf16.xpose.msra.mxu0 0
        %1150 = vmatprep.mubr.bf16.mxu0 0
        %1151 = vmatmul.mubr.bf16.gmra.mxu0 %v1113
        %v1152 = vpop.f32.mrf.mxu0
        %v1153 = vadd.f32 0.0, %v1152
        %v1154 = vpop.f32.mrf.mxu0
        %v1155 = vpop.f32.mrf.mxu0
        %v1156 = vpop.f32.mrf.mxu0
        %1157 = vdwg.mxu0
        %v1158 = vmul.f32 %v1153, 0.125
        %vm1159 = vcmask 64512
        %v1160 = vsel %vm1159, %v1158, -inf
        %1161 = vmax.xlane.f32.xlu0 %v1160
        %v1162 = vpop.xlane.xlu0 %1161
        %v1163 = vsub.f32 %v1158, %v1162
        %v1164 = vmul.f32 %v1163, 1.442695
        %v1165 = vpow.pop %v1164
        %v1166 = vsel %vm1159, %v1165, 0.0
        %1167 = vadd.xlane.f32.xlu0 %v1166
        %v1168 = vpop.xlane.xlu0 %1167
        %v1169 = vrcp.pop %v1168
        %v1170 = vmul.f32 %v1165, %v1169
        %v1171 = vpack.c.bf16 %v1170, %v1170
        %v1173 = vsel %vm1159, %v1171, 0
        %vm1175 = vcmask 1043456
        %v1177 = vsel %vm1175, %v1110, 0
        %1179 = vmatprep.subr.bf16.mxu0 0
        %1180 = vmatpush1.bf16.msra.mxu0 0
        %1181 = vmatprep.subr.bf16.mxu0 0
        %1182 = vmatpush1.bf16.msra.mxu0 0
        %1183 = vmatprep.subr.bf16.mxu0 0
        %1184 = vmatpush1.bf16.msra.mxu0 0
        %1185 = vmatprep.subr.bf16.mxu0 0
        %1186 = vmatpush1.bf16.msra.mxu0 0
        %1187 = vmatprep.subr.bf16.mxu0 0
        %1188 = vmatpush1.bf16.msra.mxu0 0
        %1189 = vmatprep.subr.bf16.mxu0 0
        %1190 = vmatpush1.bf16.msra.mxu0 0
        %1191 = vmatprep.subr.bf16.mxu0 0
        %1192 = vmatpush1.bf16.msra.mxu0 0
        %1193 = vmatprep.subr.bf16.mxu0 0
        %1194 = vmatpush1.bf16.msra.mxu0 %v1177
        %1195 = vmatprep.subr.bf16.mxu0 0
        %1196 = vmatpush2.bf16.msra.mxu0 0
        %1197 = vmatprep.subr.bf16.mxu0 0
        %1198 = vmatpush2.bf16.msra.mxu0 0
        %1199 = vmatprep.subr.bf16.mxu0 0
        %1200 = vmatpush2.bf16.msra.mxu0 0
        %1201 = vmatprep.subr.bf16.mxu0 0
        %1202 = vmatpush2.bf16.msra.mxu0 0
        %1203 = vmatprep.subr.bf16.mxu0 0
        %1204 = vmatpush2.bf16.msra.mxu0 0
        %1205 = vmatprep.subr.bf16.mxu0 0
        %1206 = vmatpush2.bf16.msra.mxu0 0
        %1207 = vmatprep.subr.bf16.mxu0 0
        %1208 = vmatpush2.bf16.msra.mxu0 0
        %1209 = vmatprep.subr.bf16.mxu0 0
        %1210 = vmatpush2.bf16.msra.mxu0 0
        %1211 = vmatprep.mubr.bf16.mxu0 0
        %1212 = vmatmul.mubr.bf16.gmra.mxu0 %v1173
        %v1213 = vpop.f32.mrf.mxu0
        %v1214 = vadd.f32 0.0, %v1213
        %v1215 = vpop.f32.mrf.mxu0
        %v1216 = vpop.f32.mrf.mxu0
        %v1217 = vpop.f32.mrf.mxu0
        %1218 = vdwg.mxu0
        %1220 = vrot.lane.b32.xlu0 %v1108, 64
        %v1221 = vpop.permute.xlu0 %1220
        %1223 = vrot.lane.b32.xlu0 %v1109, 64
        %v1224 = vpop.permute.xlu0 %1223
        %v1226 = vsel %vm1111, %v1221, 0
        %v1229 = vsel %vm1111, %v1224, 0
        %1231 = vmatprep.subr.bf16.mxu0 0
        %1232 = vmatpush1.bf16.xpose.msra.mxu0 0
        %1233 = vmatprep.subr.bf16.mxu0 0
        %1234 = vmatpush1.bf16.xpose.msra.mxu0 0
        %1235 = vmatprep.subr.bf16.mxu0 0
        %1236 = vmatpush1.bf16.xpose.msra.mxu0 0
        %1237 = vmatprep.subr.bf16.mxu0 0
        %1238 = vmatpush1.bf16.xpose.msra.mxu0 0
        %1239 = vmatprep.subr.bf16.mxu0 0
        %1240 = vmatpush1.bf16.xpose.msra.mxu0 0
        %1241 = vmatprep.subr.bf16.mxu0 0
        %1242 = vmatpush1.bf16.xpose.msra.mxu0 0
        %1243 = vmatprep.subr.bf16.mxu0 0
        %1244 = vmatpush1.bf16.xpose.msra.mxu0 0
        %1245 = vmatprep.subr.bf16.mxu0 0
        %1246 = vmatpush1.bf16.xpose.msra.mxu0 %v1229
        %1247 = vmatprep.subr.bf16.mxu0 0
        %1248 = vmatpush2.bf16.xpose.msra.mxu0 0
        %1249 = vmatprep.subr.bf16.mxu0 0
        %1250 = vmatpush2.bf16.xpose.msra.mxu0 0
        %1251 = vmatprep.subr.bf16.mxu0 0
        %1252 = vmatpush2.bf16.xpose.msra.mxu0 0
        %1253 = vmatprep.subr.bf16.mxu0 0
        %1254 = vmatpush2.bf16.xpose.msra.mxu0 0
        %1255 = vmatprep.subr.bf16.mxu0 0
        %1256 = vmatpush2.bf16.xpose.msra.mxu0 0
        %1257 = vmatprep.subr.bf16.mxu0 0
        %1258 = vmatpush2.bf16.xpose.msra.mxu0 0
        %1259 = vmatprep.subr.bf16.mxu0 0
        %1260 = vmatpush2.bf16.xpose.msra.mxu0 0
        %1261 = vmatprep.subr.bf16.mxu0 0
        %1262 = vmatpush2.bf16.xpose.msra.mxu0 0
        %1263 = vmatprep.mubr.bf16.mxu0 0
        %1264 = vmatmul.mubr.bf16.gmra.mxu0 %v1226
        %v1265 = vpop.f32.mrf.mxu0
        %v1266 = vadd.f32 0.0, %v1265
        %v1267 = vpop.f32.mrf.mxu0
        %v1268 = vpop.f32.mrf.mxu0
        %v1269 = vpop.f32.mrf.mxu0
        %1270 = vdwg.mxu0
        %v1271 = vmul.f32 %v1266, 0.125
        %v1272 = vsel %vm1159, %v1271, -inf
        %1273 = vmax.xlane.f32.xlu0 %v1272
        %v1274 = vpop.xlane.xlu0 %1273
        %v1275 = vsub.f32 %v1271, %v1274
        %v1276 = vmul.f32 %v1275, 1.442695
        %v1277 = vpow.pop %v1276
        %v1278 = vsel %vm1159, %v1277, 0.0
        %1279 = vadd.xlane.f32.xlu0 %v1278
        %v1280 = vpop.xlane.xlu0 %1279
        %v1281 = vrcp.pop %v1280
        %v1282 = vmul.f32 %v1277, %v1281
        %v1283 = vpack.c.bf16 %v1282, %v1282
        %1285 = vrot.lane.b32.xlu0 %v1110, 64
        %v1286 = vpop.permute.xlu0 %1285
        %v1288 = vsel %vm1159, %v1283, 0
        %v1291 = vsel %vm1175, %v1286, 0
        %1293 = vmatprep.subr.bf16.mxu0 0
        %1294 = vmatpush1.bf16.msra.mxu0 0
        %1295 = vmatprep.subr.bf16.mxu0 0
        %1296 = vmatpush1.bf16.msra.mxu0 0
        %1297 = vmatprep.subr.bf16.mxu0 0
        %1298 = vmatpush1.bf16.msra.mxu0 0
        %1299 = vmatprep.subr.bf16.mxu0 0
        %1300 = vmatpush1.bf16.msra.mxu0 0
        %1301 = vmatprep.subr.bf16.mxu0 0
        %1302 = vmatpush1.bf16.msra.mxu0 0
        %1303 = vmatprep.subr.bf16.mxu0 0
        %1304 = vmatpush1.bf16.msra.mxu0 0
        %1305 = vmatprep.subr.bf16.mxu0 0
        %1306 = vmatpush1.bf16.msra.mxu0 0
        %1307 = vmatprep.subr.bf16.mxu0 0
        %1308 = vmatpush1.bf16.msra.mxu0 %v1291
        %1309 = vmatprep.subr.bf16.mxu0 0
        %1310 = vmatpush2.bf16.msra.mxu0 0
        %1311 = vmatprep.subr.bf16.mxu0 0
        %1312 = vmatpush2.bf16.msra.mxu0 0
        %1313 = vmatprep.subr.bf16.mxu0 0
        %1314 = vmatpush2.bf16.msra.mxu0 0
        %1315 = vmatprep.subr.bf16.mxu0 0
        %1316 = vmatpush2.bf16.msra.mxu0 0
        %1317 = vmatprep.subr.bf16.mxu0 0
        %1318 = vmatpush2.bf16.msra.mxu0 0
        %1319 = vmatprep.subr.bf16.mxu0 0
        %1320 = vmatpush2.bf16.msra.mxu0 0
        %1321 = vmatprep.subr.bf16.mxu0 0
        %1322 = vmatpush2.bf16.msra.mxu0 0
        %1323 = vmatprep.subr.bf16.mxu0 0
        %1324 = vmatpush2.bf16.msra.mxu0 0
        %1325 = vmatprep.mubr.bf16.mxu0 0
        %1326 = vmatmul.mubr.bf16.gmra.mxu0 %v1288
        %v1327 = vpop.f32.mrf.mxu0
        %v1328 = vadd.f32 0.0, %v1327
        %v1329 = vpop.f32.mrf.mxu0
        %v1330 = vpop.f32.mrf.mxu0
        %v1331 = vpop.f32.mrf.mxu0
        %1332 = vdwg.mxu0
        %1334 = vrot.lane.b32.xlu0 %v1328, 64
        %v1335 = vpop.permute.xlu0 %1334
        %v1337 = vsel %vm1111, %v1214, %v1335
        %v1338 = vpack.c.bf16 %v1337, %v1337
        %v1355 = vunpack.c.l.b16 %v760
        %v1356 = vunpack.c.l.b16 %v761
        %v1357 = vunpack.c.l.b16 %v762
        %v1358 = vunpack.c.l.b16 %v763
        %v1359 = vunpack.c.l.b16 %v764
        %v1360 = vunpack.c.l.b16 %v765
        %v1361 = vunpack.c.l.b16 %v766
        %v1362 = vunpack.c.l.b16 %v767
        %v1363 = vunpack.c.l.b16 %v768
        %v1364 = vunpack.c.l.b16 %v769
        %v1365 = vunpack.c.l.b16 %v770
        %v1366 = vunpack.c.l.b16 %v771
        %v1367 = vunpack.c.l.b16 %v772
        %v1368 = vunpack.c.l.b16 %v773
        %v1369 = vunpack.c.l.b16 %v774
        %v1370 = vunpack.c.l.b16 %v775
        %v1371 = vpack.c.b16 %v1356, %v1355
        %v1372 = vpack.c.b16 %v1358, %v1357
        %v1373 = vpack.c.b16 %v1360, %v1359
        %v1374 = vpack.c.b16 %v1362, %v1361
        %v1375 = vpack.c.b16 %v1364, %v1363
        %v1376 = vpack.c.b16 %v1366, %v1365
        %v1377 = vpack.c.b16 %v1368, %v1367
        %v1378 = vpack.c.b16 %v1370, %v1369
        %1387 = vmatprep.subr.bf16.mxu0 0
        %1388 = vmatpush1.bf16.msra.mxu0 %v1378
        %1389 = vmatprep.subr.bf16.mxu0 0
        %1390 = vmatpush1.bf16.msra.mxu0 %v1377
        %1391 = vmatprep.subr.bf16.mxu0 0
        %1392 = vmatpush1.bf16.msra.mxu0 %v1376
        %1393 = vmatprep.subr.bf16.mxu0 0
        %1394 = vmatpush1.bf16.msra.mxu0 %v1375
        %1395 = vmatprep.subr.bf16.mxu0 0
        %1396 = vmatpush1.bf16.msra.mxu0 %v1374
        %1397 = vmatprep.subr.bf16.mxu0 0
        %1398 = vmatpush1.bf16.msra.mxu0 %v1373
        %1399 = vmatprep.subr.bf16.mxu0 0
        %1400 = vmatpush1.bf16.msra.mxu0 %v1372
        %1401 = vmatprep.subr.bf16.mxu0 0
        %1402 = vmatpush1.bf16.msra.mxu0 %v1371
        %1403 = vmatprep.subr.bf16.mxu0 0
        %1404 = vmatpush2.bf16.msra.mxu0 0
        %1405 = vmatprep.subr.bf16.mxu0 0
        %1406 = vmatpush2.bf16.msra.mxu0 0
        %1407 = vmatprep.subr.bf16.mxu0 0
        %1408 = vmatpush2.bf16.msra.mxu0 0
        %1409 = vmatprep.subr.bf16.mxu0 0
        %1410 = vmatpush2.bf16.msra.mxu0 0
        %1411 = vmatprep.subr.bf16.mxu0 0
        %1412 = vmatpush2.bf16.msra.mxu0 0
        %1413 = vmatprep.subr.bf16.mxu0 0
        %1414 = vmatpush2.bf16.msra.mxu0 0
        %1415 = vmatprep.subr.bf16.mxu0 0
        %1416 = vmatpush2.bf16.msra.mxu0 0
        %1417 = vmatprep.subr.bf16.mxu0 0
        %1418 = vmatpush2.bf16.msra.mxu0 0
        %1419 = vmatprep.mubr.bf16.mxu0 0
        %1420 = vmatmul.mubr.bf16.gmra.mxu0 %v1338
        %v1421 = vpop.f32.mrf.mxu0
        %v1422 = vadd.f32 0.0, %v1421
        %v1423 = vpop.f32.mrf.mxu0
        %v1424 = vpop.f32.mrf.mxu0
        %v1425 = vpop.f32.mrf.mxu0
        %1426 = vdwg.mxu0
        %v1427 = vadd.f32 %v720, %v1422
        %v1429 = vlaneseq
        %v1430 = vshrl.u32 %v1429, 7
        %v1431 = vsub.s32 0, %v1430
        %v1432 = vrot.slane %v725, %v1431
        %v1434 = vadd.f32 %v1427, %v1432
        %1435 = vadd.xlane.f32.xlu0 %v1434
        %v1436 = vpop.xlane.xlu0 %1435
        %v1437 = vmul.f32 %v1436, %v874
        %v1438 = vsub.f32 %v1434, %v1437
        %v1439 = vmul.f32 %v1438, %v1438
        %1440 = vadd.xlane.f32.xlu0 %v1439
        %v1441 = vpop.xlane.xlu0 %1440
        %v1442 = vmul.f32 %v1441, %v874
        %v1443 = vadd.f32 %v1442, 1e-05
        %v1444 = vrsqrt.pop %v1443
        %v1445 = vmul.f32 %v1438, %v1444
        %v1447 = vlaneseq
        %v1448 = vshrl.u32 %v1447, 7
        %v1449 = vsub.s32 0, %v1448
        %v1450 = vrot.slane %v723, %v1449
        %v1452 = vmul.f32 %v1445, %v1450
        %v1454 = vlaneseq
        %v1455 = vshrl.u32 %v1454, 7
        %v1456 = vsub.s32 0, %v1455
        %v1457 = vrot.slane %v724, %v1456
        %v1459 = vadd.f32 %v1452, %v1457
        %v1460 = vpack.c.bf16 %v1459, %v1459
        %v1462 = vlaneseq
        %v1463 = vshrl.u32 %v1462, 7
        %v1464 = vsub.s32 0, %v1463
        %v1465 = vrot.slane %v726, %v1464
        %v1466 = vlaneseq
        %v1467 = vshrl.u32 %v1466, 7
        %v1468 = vsub.s32 1, %v1467
        %v1469 = vrot.slane %v726, %v1468
        %v1470 = vlaneseq
        %v1471 = vshrl.u32 %v1470, 7
        %v1472 = vsub.s32 2, %v1471
        %v1473 = vrot.slane %v726, %v1472
        %v1474 = vlaneseq
        %v1475 = vshrl.u32 %v1474, 7
        %v1476 = vsub.s32 3, %v1475
        %v1477 = vrot.slane %v726, %v1476
        %v1514 = vunpack.c.l.b16 %v776
        %v1515 = vunpack.c.h.b16 %v776
        %v1516 = vunpack.c.l.b16 %v777
        %v1517 = vunpack.c.h.b16 %v777
        %v1518 = vunpack.c.l.b16 %v778
        %v1519 = vunpack.c.h.b16 %v778
        %v1520 = vunpack.c.l.b16 %v779
        %v1521 = vunpack.c.h.b16 %v779
        %v1522 = vunpack.c.l.b16 %v780
        %v1523 = vunpack.c.h.b16 %v780
        %v1524 = vunpack.c.l.b16 %v781
        %v1525 = vunpack.c.h.b16 %v781
        %v1526 = vunpack.c.l.b16 %v782
        %v1527 = vunpack.c.h.b16 %v782
        %v1528 = vunpack.c.l.b16 %v783
        %v1529 = vunpack.c.h.b16 %v783
        %v1530 = vunpack.c.l.b16 %v784
        %v1531 = vunpack.c.h.b16 %v784
        %v1532 = vunpack.c.l.b16 %v785
        %v1533 = vunpack.c.h.b16 %v785
        %v1534 = vunpack.c.l.b16 %v786
        %v1535 = vunpack.c.h.b16 %v786
        %v1536 = vunpack.c.l.b16 %v787
        %v1537 = vunpack.c.h.b16 %v787
        %v1538 = vunpack.c.l.b16 %v788
        %v1539 = vunpack.c.h.b16 %v788
        %v1540 = vunpack.c.l.b16 %v789
        %v1541 = vunpack.c.h.b16 %v789
        %v1542 = vunpack.c.l.b16 %v790
        %v1543 = vunpack.c.h.b16 %v790
        %v1544 = vunpack.c.l.b16 %v791
        %v1545 = vunpack.c.h.b16 %v791
        %v1546 = vunpack.c.l.b16 %v792
        %v1547 = vunpack.c.h.b16 %v792
        %v1548 = vunpack.c.l.b16 %v793
        %v1549 = vunpack.c.h.b16 %v793
        %v1550 = vunpack.c.l.b16 %v794
        %v1551 = vunpack.c.h.b16 %v794
        %v1552 = vunpack.c.l.b16 %v795
        %v1553 = vunpack.c.h.b16 %v795
        %v1554 = vunpack.c.l.b16 %v796
        %v1555 = vunpack.c.h.b16 %v796
        %v1556 = vunpack.c.l.b16 %v797
        %v1557 = vunpack.c.h.b16 %v797
        %v1558 = vunpack.c.l.b16 %v798
        %v1559 = vunpack.c.h.b16 %v798
        %v1560 = vunpack.c.l.b16 %v799
        %v1561 = vunpack.c.h.b16 %v799
        %v1562 = vunpack.c.l.b16 %v800
        %v1563 = vunpack.c.h.b16 %v800
        %v1564 = vunpack.c.l.b16 %v801
        %v1565 = vunpack.c.h.b16 %v801
        %v1566 = vunpack.c.l.b16 %v802
        %v1567 = vunpack.c.h.b16 %v802
        %v1568 = vunpack.c.l.b16 %v803
        %v1569 = vunpack.c.h.b16 %v803
        %v1570 = vunpack.c.l.b16 %v804
        %v1571 = vunpack.c.h.b16 %v804
        %v1572 = vunpack.c.l.b16 %v805
        %v1573 = vunpack.c.h.b16 %v805
        %v1574 = vunpack.c.l.b16 %v806
        %v1575 = vunpack.c.h.b16 %v806
        %v1576 = vunpack.c.l.b16 %v807
        %v1577 = vunpack.c.h.b16 %v807
        %v1578 = vpack.c.b16 %v1518, %v1514
        %v1579 = vpack.c.b16 %v1519, %v1515
        %v1580 = vpack.c.b16 %v1520, %v1516
        %v1581 = vpack.c.b16 %v1521, %v1517
        %v1582 = vpack.c.b16 %v1526, %v1522
        %v1583 = vpack.c.b16 %v1527, %v1523
        %v1584 = vpack.c.b16 %v1528, %v1524
        %v1585 = vpack.c.b16 %v1529, %v1525
        %v1586 = vpack.c.b16 %v1534, %v1530
        %v1587 = vpack.c.b16 %v1535, %v1531
        %v1588 = vpack.c.b16 %v1536, %v1532
        %v1589 = vpack.c.b16 %v1537, %v1533
        %v1590 = vpack.c.b16 %v1542, %v1538
        %v1591 = vpack.c.b16 %v1543, %v1539
        %v1592 = vpack.c.b16 %v1544, %v1540
        %v1593 = vpack.c.b16 %v1545, %v1541
        %v1594 = vpack.c.b16 %v1550, %v1546
        %v1595 = vpack.c.b16 %v1551, %v1547
        %v1596 = vpack.c.b16 %v1552, %v1548
        %v1597 = vpack.c.b16 %v1553, %v1549
        %v1598 = vpack.c.b16 %v1558, %v1554
        %v1599 = vpack.c.b16 %v1559, %v1555
        %v1600 = vpack.c.b16 %v1560, %v1556
        %v1601 = vpack.c.b16 %v1561, %v1557
        %v1602 = vpack.c.b16 %v1566, %v1562
        %v1603 = vpack.c.b16 %v1567, %v1563
        %v1604 = vpack.c.b16 %v1568, %v1564
        %v1605 = vpack.c.b16 %v1569, %v1565
        %v1606 = vpack.c.b16 %v1574, %v1570
        %v1607 = vpack.c.b16 %v1575, %v1571
        %v1608 = vpack.c.b16 %v1576, %v1572
        %v1609 = vpack.c.b16 %v1577, %v1573
        %1642 = vmatprep.subr.bf16.mxu0 %v1607
        %1643 = vmatpush1.bf16.msra.mxu0 %v1606
        %1644 = vmatprep.subr.bf16.mxu0 %v1603
        %1645 = vmatpush1.bf16.msra.mxu0 %v1602
        %1646 = vmatprep.subr.bf16.mxu0 %v1599
        %1647 = vmatpush1.bf16.msra.mxu0 %v1598
        %1648 = vmatprep.subr.bf16.mxu0 %v1595
        %1649 = vmatpush1.bf16.msra.mxu0 %v1594
        %1650 = vmatprep.subr.bf16.mxu0 %v1591
        %1651 = vmatpush1.bf16.msra.mxu0 %v1590
        %1652 = vmatprep.subr.bf16.mxu0 %v1587
        %1653 = vmatpush1.bf16.msra.mxu0 %v1586
        %1654 = vmatprep.subr.bf16.mxu0 %v1583
        %1655 = vmatpush1.bf16.msra.mxu0 %v1582
        %1656 = vmatprep.subr.bf16.mxu0 %v1579
        %1657 = vmatpush1.bf16.msra.mxu0 %v1578
        %1658 = vmatprep.subr.bf16.mxu0 0
        %1659 = vmatpush2.bf16.msra.mxu0 0
        %1660 = vmatprep.subr.bf16.mxu0 0
        %1661 = vmatpush2.bf16.msra.mxu0 0
        %1662 = vmatprep.subr.bf16.mxu0 0
        %1663 = vmatpush2.bf16.msra.mxu0 0
        %1664 = vmatprep.subr.bf16.mxu0 0
        %1665 = vmatpush2.bf16.msra.mxu0 0
        %1666 = vmatprep.subr.bf16.mxu0 0
        %1667 = vmatpush2.bf16.msra.mxu0 0
        %1668 = vmatprep.subr.bf16.mxu0 0
        %1669 = vmatpush2.bf16.msra.mxu0 0
        %1670 = vmatprep.subr.bf16.mxu0 0
        %1671 = vmatpush2.bf16.msra.mxu0 0
        %1672 = vmatprep.subr.bf16.mxu0 0
        %1673 = vmatpush2.bf16.msra.mxu0 0
        %1674 = vmatprep.mubr.bf16.mxu0 0
        %1675 = vmatmul.mubr.bf16.gmra.mxu0 %v1460
        %v1676 = vpop.f32.mrf.mxu0
        %v1677 = vadd.f32 %v1465, %v1676
        %v1678 = vpop.f32.mrf.mxu0
        %v1679 = vadd.f32 %v1469, %v1678
        %v1680 = vpop.f32.mrf.mxu0
        %v1681 = vpop.f32.mrf.mxu0
        %1682 = vdwg.mxu0
        %1683 = vmatprep.subr.bf16.mxu0 %v1609
        %1684 = vmatpush1.bf16.msra.mxu0 %v1608
        %1685 = vmatprep.subr.bf16.mxu0 %v1605
        %1686 = vmatpush1.bf16.msra.mxu0 %v1604
        %1687 = vmatprep.subr.bf16.mxu0 %v1601
        %1688 = vmatpush1.bf16.msra.mxu0 %v1600
        %1689 = vmatprep.subr.bf16.mxu0 %v1597
        %1690 = vmatpush1.bf16.msra.mxu0 %v1596
        %1691 = vmatprep.subr.bf16.mxu0 %v1593
        %1692 = vmatpush1.bf16.msra.mxu0 %v1592
        %1693 = vmatprep.subr.bf16.mxu0 %v1589
        %1694 = vmatpush1.bf16.msra.mxu0 %v1588
        %1695 = vmatprep.subr.bf16.mxu0 %v1585
        %1696 = vmatpush1.bf16.msra.mxu0 %v1584
        %1697 = vmatprep.subr.bf16.mxu0 %v1581
        %1698 = vmatpush1.bf16.msra.mxu0 %v1580
        %1699 = vmatprep.subr.bf16.mxu0 0
        %1700 = vmatpush2.bf16.msra.mxu0 0
        %1701 = vmatprep.subr.bf16.mxu0 0
        %1702 = vmatpush2.bf16.msra.mxu0 0
        %1703 = vmatprep.subr.bf16.mxu0 0
        %1704 = vmatpush2.bf16.msra.mxu0 0
        %1705 = vmatprep.subr.bf16.mxu0 0
        %1706 = vmatpush2.bf16.msra.mxu0 0
        %1707 = vmatprep.subr.bf16.mxu0 0
        %1708 = vmatpush2.bf16.msra.mxu0 0
        %1709 = vmatprep.subr.bf16.mxu0 0
        %1710 = vmatpush2.bf16.msra.mxu0 0
        %1711 = vmatprep.subr.bf16.mxu0 0
        %1712 = vmatpush2.bf16.msra.mxu0 0
        %1713 = vmatprep.subr.bf16.mxu0 0
        %1714 = vmatpush2.bf16.msra.mxu0 0
        %1715 = vmatprep.mubr.bf16.mxu0 0
        %1716 = vmatmul.mubr.bf16.gmra.mxu0 %v1460
        %v1717 = vpop.f32.mrf.mxu0
        %v1718 = vadd.f32 %v1473, %v1717
        %v1719 = vpop.f32.mrf.mxu0
        %v1720 = vadd.f32 %v1477, %v1719
        %v1721 = vpop.f32.mrf.mxu0
        %v1722 = vpop.f32.mrf.mxu0
        %1723 = vdwg.mxu0
        %v1724 = vmul.f32 %v1677, %v1677
        %v1725 = vmul.f32 %v1679, %v1679
        %v1726 = vmul.f32 %v1718, %v1718
        %v1727 = vmul.f32 %v1720, %v1720
        %v1728 = vmul.f32 %v1677, %v1724
        %v1729 = vmul.f32 %v1679, %v1725
        %v1730 = vmul.f32 %v1718, %v1726
        %v1731 = vmul.f32 %v1720, %v1727
        %v1732 = vmul.f32 %v1728, 0.044715
        %v1733 = vmul.f32 %v1729, 0.044715
        %v1734 = vmul.f32 %v1730, 0.044715
        %v1735 = vmul.f32 %v1731, 0.044715
        %v1736 = vadd.f32 %v1677, %v1732
        %v1737 = vadd.f32 %v1679, %v1733
        %v1738 = vadd.f32 %v1718, %v1734
        %v1739 = vadd.f32 %v1720, %v1735
        %v1740 = vmul.f32 %v1736, 0.7978846
        %v1741 = vmul.f32 %v1737, 0.7978846
        %v1742 = vmul.f32 %v1738, 0.7978846
        %v1743 = vmul.f32 %v1739, 0.7978846
        %v1744 = vtanh.pop %v1740
        %v1745 = vtanh.pop %v1741
        %v1746 = vtanh.pop %v1742
        %v1747 = vtanh.pop %v1743
        %v1748 = vadd.f32 %v1744, 1.0
        %v1749 = vadd.f32 %v1745, 1.0
        %v1750 = vadd.f32 %v1746, 1.0
        %v1751 = vadd.f32 %v1747, 1.0
        %v1752 = vmul.f32 %v1748, 0.5
        %v1753 = vmul.f32 %v1749, 0.5
        %v1754 = vmul.f32 %v1750, 0.5
        %v1755 = vmul.f32 %v1751, 0.5
        %v1756 = vmul.f32 %v1677, %v1752
        %v1757 = vmul.f32 %v1679, %v1753
        %v1758 = vmul.f32 %v1718, %v1754
        %v1759 = vmul.f32 %v1720, %v1755
        %v1760 = vpack.c.bf16 %v1756, %v1756
        %v1761 = vpack.c.bf16 %v1757, %v1757
        %v1762 = vpack.c.bf16 %v1758, %v1758
        %v1763 = vpack.c.bf16 %v1759, %v1759
        %v1828 = vunpack.c.l.b16 %v808
        %v1829 = vunpack.c.l.b16 %v809
        %v1830 = vunpack.c.l.b16 %v810
        %v1831 = vunpack.c.l.b16 %v811
        %v1832 = vunpack.c.l.b16 %v812
        %v1833 = vunpack.c.l.b16 %v813
        %v1834 = vunpack.c.l.b16 %v814
        %v1835 = vunpack.c.l.b16 %v815
        %v1836 = vunpack.c.l.b16 %v816
        %v1837 = vunpack.c.l.b16 %v817
        %v1838 = vunpack.c.l.b16 %v818
        %v1839 = vunpack.c.l.b16 %v819
        %v1840 = vunpack.c.l.b16 %v820
        %v1841 = vunpack.c.l.b16 %v821
        %v1842 = vunpack.c.l.b16 %v822
        %v1843 = vunpack.c.l.b16 %v823
        %v1844 = vunpack.c.l.b16 %v824
        %v1845 = vunpack.c.l.b16 %v825
        %v1846 = vunpack.c.l.b16 %v826
        %v1847 = vunpack.c.l.b16 %v827
        %v1848 = vunpack.c.l.b16 %v828
        %v1849 = vunpack.c.l.b16 %v829
        %v1850 = vunpack.c.l.b16 %v830
        %v1851 = vunpack.c.l.b16 %v831
        %v1852 = vunpack.c.l.b16 %v832
        %v1853 = vunpack.c.l.b16 %v833
        %v1854 = vunpack.c.l.b16 %v834
        %v1855 = vunpack.c.l.b16 %v835
        %v1856 = vunpack.c.l.b16 %v836
        %v1857 = vunpack.c.l.b16 %v837
        %v1858 = vunpack.c.l.b16 %v838
        %v1859 = vunpack.c.l.b16 %v839
        %v1860 = vunpack.c.l.b16 %v840
        %v1861 = vunpack.c.l.b16 %v841
        %v1862 = vunpack.c.l.b16 %v842
        %v1863 = vunpack.c.l.b16 %v843
        %v1864 = vunpack.c.l.b16 %v844
        %v1865 = vunpack.c.l.b16 %v845
        %v1866 = vunpack.c.l.b16 %v846
        %v1867 = vunpack.c.l.b16 %v847
        %v1868 = vunpack.c.l.b16 %v848
        %v1869 = vunpack.c.l.b16 %v849
        %v1870 = vunpack.c.l.b16 %v850
        %v1871 = vunpack.c.l.b16 %v851
        %v1872 = vunpack.c.l.b16 %v852
        %v1873 = vunpack.c.l.b16 %v853
        %v1874 = vunpack.c.l.b16 %v854
        %v1875 = vunpack.c.l.b16 %v855
        %v1876 = vunpack.c.l.b16 %v856
        %v1877 = vunpack.c.l.b16 %v857
        %v1878 = vunpack.c.l.b16 %v858
        %v1879 = vunpack.c.l.b16 %v859
        %v1880 = vunpack.c.l.b16 %v860
        %v1881 = vunpack.c.l.b16 %v861
        %v1882 = vunpack.c.l.b16 %v862
        %v1883 = vunpack.c.l.b16 %v863
        %v1884 = vunpack.c.l.b16 %v864
        %v1885 = vunpack.c.l.b16 %v865
        %v1886 = vunpack.c.l.b16 %v866
        %v1887 = vunpack.c.l.b16 %v867
        %v1888 = vunpack.c.l.b16 %v868
        %v1889 = vunpack.c.l.b16 %v869
        %v1890 = vunpack.c.l.b16 %v870
        %v1891 = vunpack.c.l.b16 %v871
        %v1892 = vpack.c.b16 %v1829, %v1828
        %v1893 = vpack.c.b16 %v1831, %v1830
        %v1894 = vpack.c.b16 %v1833, %v1832
        %v1895 = vpack.c.b16 %v1835, %v1834
        %v1896 = vpack.c.b16 %v1837, %v1836
        %v1897 = vpack.c.b16 %v1839, %v1838
        %v1898 = vpack.c.b16 %v1841, %v1840
        %v1899 = vpack.c.b16 %v1843, %v1842
        %v1900 = vpack.c.b16 %v1845, %v1844
        %v1901 = vpack.c.b16 %v1847, %v1846
        %v1902 = vpack.c.b16 %v1849, %v1848
        %v1903 = vpack.c.b16 %v1851, %v1850
        %v1904 = vpack.c.b16 %v1853, %v1852
        %v1905 = vpack.c.b16 %v1855, %v1854
        %v1906 = vpack.c.b16 %v1857, %v1856
        %v1907 = vpack.c.b16 %v1859, %v1858
        %v1908 = vpack.c.b16 %v1861, %v1860
        %v1909 = vpack.c.b16 %v1863, %v1862
        %v1910 = vpack.c.b16 %v1865, %v1864
        %v1911 = vpack.c.b16 %v1867, %v1866
        %v1912 = vpack.c.b16 %v1869, %v1868
        %v1913 = vpack.c.b16 %v1871, %v1870
        %v1914 = vpack.c.b16 %v1873, %v1872
        %v1915 = vpack.c.b16 %v1875, %v1874
        %v1916 = vpack.c.b16 %v1877, %v1876
        %v1917 = vpack.c.b16 %v1879, %v1878
        %v1918 = vpack.c.b16 %v1881, %v1880
        %v1919 = vpack.c.b16 %v1883, %v1882
        %v1920 = vpack.c.b16 %v1885, %v1884
        %v1921 = vpack.c.b16 %v1887, %v1886
        %v1922 = vpack.c.b16 %v1889, %v1888
        %v1923 = vpack.c.b16 %v1891, %v1890
        %1956 = vmatprep.subr.bf16.mxu0 0
        %1957 = vmatpush1.bf16.msra.mxu0 %v1899
        %1958 = vmatprep.subr.bf16.mxu0 0
        %1959 = vmatpush1.bf16.msra.mxu0 %v1898
        %1960 = vmatprep.subr.bf16.mxu0 0
        %1961 = vmatpush1.bf16.msra.mxu0 %v1897
        %1962 = vmatprep.subr.bf16.mxu0 0
        %1963 = vmatpush1.bf16.msra.mxu0 %v1896
        %1964 = vmatprep.subr.bf16.mxu0 0
        %1965 = vmatpush1.bf16.msra.mxu0 %v1895
        %1966 = vmatprep.subr.bf16.mxu0 0
        %1967 = vmatpush1.bf16.msra.mxu0 %v1894
        %1968 = vmatprep.subr.bf16.mxu0 0
        %1969 = vmatpush1.bf16.msra.mxu0 %v1893
        %1970 = vmatprep.subr.bf16.mxu0 0
        %1971 = vmatpush1.bf16.msra.mxu0 %v1892
        %1972 = vmatprep.subr.bf16.mxu0 0
        %1973 = vmatpush2.bf16.msra.mxu0 %v1907
        %1974 = vmatprep.subr.bf16.mxu0 0
        %1975 = vmatpush2.bf16.msra.mxu0 %v1906
        %1976 = vmatprep.subr.bf16.mxu0 0
        %1977 = vmatpush2.bf16.msra.mxu0 %v1905
        %1978 = vmatprep.subr.bf16.mxu0 0
        %1979 = vmatpush2.bf16.msra.mxu0 %v1904
        %1980 = vmatprep.subr.bf16.mxu0 0
        %1981 = vmatpush2.bf16.msra.mxu0 %v1903
        %1982 = vmatprep.subr.bf16.mxu0 0
        %1983 = vmatpush2.bf16.msra.mxu0 %v1902
        %1984 = vmatprep.subr.bf16.mxu0 0
        %1985 = vmatpush2.bf16.msra.mxu0 %v1901
        %1986 = vmatprep.subr.bf16.mxu0 0
        %1987 = vmatpush2.bf16.msra.mxu0 %v1900
        %1988 = vmatprep.mubr.bf16.mxu0 %v1761
        %1989 = vmatmul.mubr.bf16.gmra.mxu0 %v1760
        %v1990 = vpop.f32.mrf.mxu0
        %v1991 = vadd.f32 0.0, %v1990
        %v1992 = vpop.f32.mrf.mxu0
        %v1993 = vpop.f32.mrf.mxu0
        %v1994 = vpop.f32.mrf.mxu0
        %1995 = vdwg.mxu0
        %1996 = vmatprep.subr.bf16.mxu0 0
        %1997 = vmatpush1.bf16.msra.mxu0 %v1915
        %1998 = vmatprep.subr.bf16.mxu0 0
        %1999 = vmatpush1.bf16.msra.mxu0 %v1914
        %2000 = vmatprep.subr.bf16.mxu0 0
        %2001 = vmatpush1.bf16.msra.mxu0 %v1913
        %2002 = vmatprep.subr.bf16.mxu0 0
        %2003 = vmatpush1.bf16.msra.mxu0 %v1912
        %2004 = vmatprep.subr.bf16.mxu0 0
        %2005 = vmatpush1.bf16.msra.mxu0 %v1911
        %2006 = vmatprep.subr.bf16.mxu0 0
        %2007 = vmatpush1.bf16.msra.mxu0 %v1910
        %2008 = vmatprep.subr.bf16.mxu0 0
        %2009 = vmatpush1.bf16.msra.mxu0 %v1909
        %2010 = vmatprep.subr.bf16.mxu0 0
        %2011 = vmatpush1.bf16.msra.mxu0 %v1908
        %2012 = vmatprep.subr.bf16.mxu0 0
        %2013 = vmatpush2.bf16.msra.mxu0 %v1923
        %2014 = vmatprep.subr.bf16.mxu0 0
        %2015 = vmatpush2.bf16.msra.mxu0 %v1922
        %2016 = vmatprep.subr.bf16.mxu0 0
        %2017 = vmatpush2.bf16.msra.mxu0 %v1921
        %2018 = vmatprep.subr.bf16.mxu0 0
        %2019 = vmatpush2.bf16.msra.mxu0 %v1920
        %2020 = vmatprep.subr.bf16.mxu0 0
        %2021 = vmatpush2.bf16.msra.mxu0 %v1919
        %2022 = vmatprep.subr.bf16.mxu0 0
        %2023 = vmatpush2.bf16.msra.mxu0 %v1918
        %2024 = vmatprep.subr.bf16.mxu0 0
        %2025 = vmatpush2.bf16.msra.mxu0 %v1917
        %2026 = vmatprep.subr.bf16.mxu0 0
        %2027 = vmatpush2.bf16.msra.mxu0 %v1916
        %2028 = vmatprep.mubr.bf16.mxu0 %v1763
        %2029 = vmatmul.mubr.bf16.gmra.mxu0 %v1762
        %v2030 = vpop.f32.mrf.mxu0
        %v2031 = vadd.f32 %v1991, %v2030
        %v2032 = vpop.f32.mrf.mxu0
        %v2033 = vpop.f32.mrf.mxu0
        %v2034 = vpop.f32.mrf.mxu0
        %2035 = vdwg.mxu0
        %v2036 = vadd.f32 %v1434, %v2031
        %v2038 = vlaneseq
        %v2039 = vshrl.u32 %v2038, 7
        %v2040 = vsub.s32 0, %v2039
        %v2041 = vrot.slane %v727, %v2040
        %v2043 = vadd.f32 %v2036, %v2041
        %2044 = vst [vmem:[#allocation2] sm:$0xff] %v2043
        %p2045 = scmp.eq.s32.totalorder %s39, 1
        // Predicated region
        $region93: #{bert_embedder_forward.1} parent=75 // pred_check
          %p2046 = pneg %p2045
        $region94: #{bert_embedder_forward.1} parent=75 // pred_check_branch
          %2048 = sbr.rel (%p2046) target = $region96
        $region95: #{bert_embedder_forward.1} parent=75 // pred_region
          %v2049 = vld [vmem:[%s12] sm:$0x1]
          %v2050 = vld [vmem:[%s13] sm:$0x1]
          %2051 = vadd.xlane.f32.xlu0 %v2043
          %v2052 = vpop.xlane.xlu0 %2051
          %v2053 = vmul.f32 %v2052, %v874
          %v2054 = vsub.f32 %v2043, %v2053
          %v2055 = vmul.f32 %v2054, %v2054
          %2056 = vadd.xlane.f32.xlu0 %v2055
          %v2057 = vpop.xlane.xlu0 %2056
          %v2058 = vmul.f32 %v2057, %v874
          %v2059 = vadd.f32 %v2058, 1e-05
          %v2060 = vrsqrt.pop %v2059
          %v2061 = vmul.f32 %v2054, %v2060
          %v2063 = vlaneseq
          %v2064 = vshrl.u32 %v2063, 7
          %v2065 = vsub.s32 0, %v2064
          %v2066 = vrot.slane %v2049, %v2065
          %v2068 = vmul.f32 %v2061, %v2066
          %v2070 = vlaneseq
          %v2071 = vshrl.u32 %v2070, 7
          %v2072 = vsub.s32 0, %v2071
          %v2073 = vrot.slane %v2050, %v2072
          %v2075 = vadd.f32 %v2068, %v2073
          %2076 = vst [vmem:[%s681] sm:$0xff] %v2075
        $region96: #{bert_embedder_forward.1} parent=75 // pred_fallthru
          _
        %s2077 = sand.u32 %s408, 1
        %s2078 = scalar_lea.sflag [#allocation5], %s2077
        %s2079 = sand.u32 %s408, 1
        %s2080 = smul.addr %s2079, 8
        %s2081 = scalar_lea.vmem [#allocation9], %s2080
        // Predicated region
        $region97: #{bert_embedder_forward.1} parent=75 // pred_check
          %p2082 = pneg %p418
        $region98: #{bert_embedder_forward.1} parent=75 // pred_check_branch
          %2084 = sbr.rel (%p2082) target = $region100
        $region99: #{bert_embedder_forward.1} parent=75 // pred_region
          %s2086 = ssub.s32 128, 128
          %2087 = vsyncadd %s2078, %s2086
          %s2088 = smul.addr %s38, 128
          %s2089 = scalar_lea.hbm %s14, %s2088
          %s2091 = sshll.u32 %s2081, 4
          %s2092 = int_to_ptr.vmem [resolvable:$true] %s2091
          %2094 = dma.vmem_to_hbm [thread:$0]  %s2092, 128, %s2089, %s2078
        $region100: #{bert_embedder_forward.1} parent=75 // pred_fallthru
          _
      $region76: #{bert_embedder_forward.1} parent=5 // pred_fallthru
        _
      %p2095 = scmp.le.s32.totalorder 2, %s29
      // Predicated region
      $region101: #{bert_embedder_forward.1} parent=5 // pred_check
        %p2096 = pneg %p2095
      $region102: #{bert_embedder_forward.1} parent=5 // pred_check_branch
        %2098 = sbr.rel (%p2096) target = $region104
      $region103: #{bert_embedder_forward.1} parent=5 // pred_region
        %s2099 = ssub.s32 %s29, 2
        // Predicated region
        $region105: #{bert_embedder_forward.1} parent=103 // pred_check
          %p2100 = pneg %p424
        $region106: #{bert_embedder_forward.1} parent=103 // pred_check_branch
          %2102 = sbr.rel (%p2100) target = $region108
        $region107: #{bert_embedder_forward.1} parent=103 // pred_region
          %s2103 = sand.u32 %s409, 1
          %s2104 = scalar_lea.sflag [#allocation5], %s2103
          %s2105 = sand.u32 %s409, 1
          %s2106 = smul.addr %s2105, 8
          %s2107 = scalar_lea.vmem [#allocation9], %s2106
          %2108 = dma.done %s2104, 128
        $region108: #{bert_embedder_forward.1} parent=103 // pred_fallthru
          _
      $region104: #{bert_embedder_forward.1} parent=5 // pred_fallthru
        _
    $region6: #{bert_embedder_forward.1} parent=1 // loop_footer
      %s33 = sadd.s32 1, %s29
    $region7: #{bert_embedder_forward.1} parent=1 // loop_footer_branch
      %28 = sbr.rel target = $region3
    $region8: #{bert_embedder_forward.1} parent=1 // loop_exit
      _
    %2109 = vsyncpa [#allocation4], 1
    %s2110 = scalar_lea.sflag [#allocation4], 1
    %2111 = vsyncpa %s2110, 1
    %2112 = vsyncpa [#allocation7], 1
    %s2113 = scalar_lea.sflag [#allocation7], 1
    %2114 = vsyncpa %s2113, 1
    %2115 = vsyncpa [#allocation5], 1
    %s2116 = scalar_lea.sflag [#allocation5], 1
    %2117 = vsyncpa %s2116, 1

</llo_original>
